<compile_context>
chip_gen: v5e
topology: v5e:2x2
jax: 0.10.0
libtpu: 0.0.40
codegen_flags: <defaults>
</compile_context>

<pallas_src>
import math

import jax
import jax.numpy as jnp
from jax.experimental import pallas as pl
from jax.experimental.pallas import tpu as pltpu


# --------------------------------------------------------------------------
# generation-dependent tuning
# --------------------------------------------------------------------------
def _vmem_capacity_bytes():
    try:
        return int(pltpu.get_tpu_info().vmem_capacity_bytes)
    except Exception:
        return 64 * 1024 * 1024          # conservative fallback (v7x-sized)


_VMEM_CAP = _vmem_capacity_bytes()
_SMALL_VMEM = _VMEM_CAP <= 64 * 1024 * 1024          # v7x-class chip
_VMEM_LIMIT = min((_VMEM_CAP * 3) // 4, 100 * 1024 * 1024)
_BB_MAX = 4 if _SMALL_VMEM else 8                    # batch items / mixer tile
_TB_MAX = 16 if _SMALL_VMEM else 32                  # batch items / head tile

_GELU_EXACT = False                                  # True -> erf (torch-exact)


# --------------------------------------------------------------------------
# in-kernel helpers (pure jnp, f32)
# --------------------------------------------------------------------------
def _gelu_exact(x):
    # exact (erf-based) GELU, matching torch.nn.GELU() default
    return 0.5 * x * (1.0 + jax.lax.erf(x * jnp.float32(1.0 / math.sqrt(2.0))))


def _gelu(x):
    if _GELU_EXACT:
        return _gelu_exact(x)
    # tanh approximation: goes to the EUP slot instead of a VPU erf polynomial
    c = jnp.float32(math.sqrt(2.0 / math.pi))
    return 0.5 * x * (1.0 + jnp.tanh(c * (x + jnp.float32(0.044715) * (x * x * x))))


def _layernorm(x, gamma, beta, eps):
    mu = jnp.mean(x, axis=-1, keepdims=True)
    xc = x - mu
    var = jnp.mean(xc * xc, axis=-1, keepdims=True)
    return xc * jax.lax.rsqrt(var + eps) * gamma + beta


# --------------------------------------------------------------------------
# kernels
# --------------------------------------------------------------------------
def mixer_blocks_kernel(
    patches_ref, pw_ref, pb_ref,
    g1_ref, b1_ref, wt1_ref, bt1_ref, wt2_ref, bt2_ref,
    g2_ref, b2_ref, wc1_ref, bc1_ref, wc2_ref, bc2_ref,
    o_ref,
):
    # grid = (batch_tiles, num_blocks); block axis innermost ('arbitrary').
    # o_ref's block index ignores blk -> it stays resident in VMEM across the
    # block axis and acts as the f32 residual-stream accumulator.
    blk = pl.program_id(1)
    Bb = patches_ref.shape[0]

    # ---- patch embedding, fused: only on the first block step -------------
    @pl.when(blk == 0)
    def _():
        pw = pw_ref[...]                                        # [CPP, D] bf16
        pb = pb_ref[...]                                        # [1, D]   f32
        for b in range(Bb):
            o_ref[b] = (
                jnp.dot(patches_ref[b], pw, preferred_element_type=jnp.float32)
                + pb
            )

    g1 = g1_ref[0]; b1 = b1_ref[0]                              # [1, D]
    wt1 = wt1_ref[0]; bt1 = bt1_ref[0]                          # [T, N], [T, 1]
    wt2 = wt2_ref[0]; bt2 = bt2_ref[0]                          # [N, T], [N, 1]
    g2 = g2_ref[0]; b2 = b2_ref[0]                              # [1, D]
    wc1 = wc1_ref[0]; bc1 = bc1_ref[0]                          # [D, Cd], [1, Cd]
    wc2 = wc2_ref[0]; bc2 = bc2_ref[0]                          # [Cd, D], [1, D]

    # Unrolled per-batch-item 2-D matmuls with SHARED weights: no weight
    # replication (broadcast_to) and no (Bb,N,D)<->(Bb*N,D) relayout.
    for b in range(Bb):
        x = o_ref[b]                                            # [N, D] f32

        # ---- token mixing (reoriented: h = W1 @ xn, y = W2 @ h) ----------
        xn = _layernorm(x, g1, b1, 1e-6).astype(jnp.bfloat16)   # [N, D]
        h = jnp.dot(wt1, xn, preferred_element_type=jnp.float32) + bt1
        h = _gelu(h)                                            # [T, D] f32
        y = jnp.dot(wt2, h.astype(jnp.bfloat16),
                    preferred_element_type=jnp.float32) + bt2   # [N, D]
        x = x + y

        # ---- channel mixing ----------------------------------------------
        xn = _layernorm(x, g2, b2, 1e-6).astype(jnp.bfloat16)   # [N, D]
        h = jnp.dot(xn, wc1, preferred_element_type=jnp.float32) + bc1
        h = _gelu(h)                                            # [N, Cd] f32
        y = jnp.dot(h.astype(jnp.bfloat16), wc2,
                    preferred_element_type=jnp.float32) + bc2   # [N, D]
        o_ref[b] = x + y


def head_kernel(x_ref, g_ref, b_ref, w_ref, bh_ref, o_ref):
    # x: [TB, N, D] f32 -> LayerNorm(eps=1e-5) -> mean over tokens -> Linear
    xn = _layernorm(x_ref[...], g_ref[...], b_ref[...], 1e-5)
    pooled = jnp.mean(xn, axis=1)                               # [TB, D] f32
    o_ref[...] = (
        jnp.dot(pooled.astype(jnp.bfloat16), w_ref[...],
                preferred_element_type=jnp.float32)
        + bh_ref[...]
    )


# --------------------------------------------------------------------------
# pallas_call wrappers
# --------------------------------------------------------------------------
def mixer_embed_blocks(patches, proj_w_t, proj_b, bp):
    """Fused patch embedding + all mixer blocks in one pallas_call."""
    B, N, K = patches.shape
    D = proj_w_t.shape[1]
    L = bp["wt1"].shape[0]

    Bb = min(_BB_MAX, B)
    if _SMALL_VMEM and B > 1 and pl.cdiv(B, Bb) < 2:
        # v7x has 2 TensorCores: make sure the 'parallel' axis has >=2 tiles.
        Bb = max(1, pl.cdiv(B, 2))
    grid = (pl.cdiv(B, Bb), L)

    def xmap(bt, blk):
        return (bt, 0, 0)

    def wmap(bt, blk):
        return (0, 0)

    def pmap(bt, blk):
        return (blk, 0, 0)

    param_order = ["g1", "b1", "wt1", "bt1", "wt2", "bt2",
                   "g2", "b2", "wc1_t", "bc1", "wc2_t", "bc2"]
    args = [bp[k] for k in param_order]
    param_specs = [pl.BlockSpec((1,) + a.shape[1:], pmap) for a in args]

    return pl.pallas_call(
        mixer_blocks_kernel,
        out_shape=jax.ShapeDtypeStruct((B, N, D), jnp.float32),
        grid=grid,
        in_specs=[
            pl.BlockSpec((Bb, N, K), xmap),     # patches (resident across blk)
            pl.BlockSpec((K, D), wmap),         # proj weight
            pl.BlockSpec((1, D), wmap),         # proj bias
        ] + param_specs,
        out_specs=pl.BlockSpec((Bb, N, D), xmap),   # resident accumulator
        compiler_params=pltpu.CompilerParams(
            dimension_semantics=("parallel", "arbitrary"),
            vmem_limit_bytes=_VMEM_LIMIT),
    )(patches, proj_w_t, proj_b, *args)


def head(x, norm_g, norm_b, head_w_t, head_b):
    B, N, D = x.shape
    C = head_w_t.shape[1]
    Cp = ((C + 127) // 128) * 128               # lane-dense output stores
    if Cp != C:
        head_w_t = jnp.pad(head_w_t, ((0, 0), (0, Cp - C)))
        head_b = jnp.pad(head_b, ((0, 0), (0, Cp - C)))

    TB = min(B, _TB_MAX)
    grid = (pl.cdiv(B, TB),)
    out = pl.pallas_call(
        head_kernel,
        out_shape=jax.ShapeDtypeStruct((B, Cp), jnp.float32),
        grid=grid,
        in_specs=[
            pl.BlockSpec((TB, N, D), lambda i: (i, 0, 0)),
            pl.BlockSpec((1, D), lambda i: (0, 0)),
            pl.BlockSpec((1, D), lambda i: (0, 0)),
            pl.BlockSpec((D, Cp), lambda i: (0, 0)),
            pl.BlockSpec((1, Cp), lambda i: (0, 0)),
        ],
        out_specs=pl.BlockSpec((TB, Cp), lambda i: (i, 0)),
        compiler_params=pltpu.CompilerParams(
            dimension_semantics=("parallel",),
            vmem_limit_bytes=_VMEM_LIMIT),
    )(x, norm_g, norm_b, head_w_t, head_b)
    return out[:, :C]


def mlp_mixer_forward(images, params, *, patch_size):
    """images: [B, 3, img_size, img_size] (NCHW, like PyTorch)."""
    B, C, H, W = images.shape
    P = patch_size
    gh, gw = H // P, W // P
    N = gh * gw

    # glue: NCHW -> [B, N, C*P*P]   (equivalent to Conv2d(kernel=P, stride=P))
    patches = (
        images.reshape(B, C, gh, P, gw, P)
        .transpose(0, 2, 4, 1, 3, 5)
        .reshape(B, N, C * P * P)
    ).astype(jnp.bfloat16)

    x = mixer_embed_blocks(patches, params["proj_w_t"], params["proj_b"],
                           params["blocks"])
    return head(x, params["norm_g"], params["norm_b"],
                params["head_w_t"], params["head_b"])


mlp_mixer_forward_jit = jax.jit(mlp_mixer_forward, static_argnames=("patch_size",))


# --------------------------------------------------------------------------
# deterministic parameter init (mirrors MLPMixer.init_weights), kernel layout:
# weights pre-transposed, stacked over blocks, stored in bf16; biases/LN in f32
# --------------------------------------------------------------------------
def init_params(key, img_size, patch_size, embed_dim, num_blocks, num_classes,
                in_chans=3):
    gs = img_size // patch_size
    N = gs * gs
    T = int(0.5 * embed_dim)          # tokens_dim
    Cd = int(4.0 * embed_dim)         # channels_dim
    L = num_blocks

    keys = iter(jax.random.split(key, 2 + 4 * num_blocks))

    def xavier(k, out_f, in_f):
        limit = math.sqrt(6.0 / (in_f + out_f))
        return jax.random.uniform(k, (out_f, in_f), jnp.float32, -limit, limit)

    # Conv2d: kaiming_normal_ (fan_in, gain sqrt(2)), zero bias
    fan_in = in_chans * patch_size * patch_size
    proj_w = (
        jax.random.normal(next(keys),
                          (embed_dim, in_chans, patch_size, patch_size),
                          jnp.float32)
        * math.sqrt(2.0 / fan_in)
    )
    proj_w_t = proj_w.reshape(embed_dim, fan_in).T.astype(jnp.bfloat16)  # [K, D]
    proj_b = jnp.zeros((1, embed_dim), jnp.float32)

    wt1 = jnp.stack([xavier(next(keys), T, N) for _ in range(L)])        # [L,T,N]
    wt2 = jnp.stack([xavier(next(keys), N, T) for _ in range(L)])        # [L,N,T]
    wc1 = jnp.stack([xavier(next(keys), Cd, embed_dim) for _ in range(L)])
    wc2 = jnp.stack([xavier(next(keys), embed_dim, Cd) for _ in range(L)])
    # RNG keys are drawn grouped by parameter type rather than interleaved per
    # block as PyTorch's init loop would; distributions match, values don't.

    blocks = dict(
        g1=jnp.ones((L, 1, embed_dim), jnp.float32),
        b1=jnp.zeros((L, 1, embed_dim), jnp.float32),
        wt1=wt1.astype(jnp.bfloat16),                       # used as W1 @ xn
        bt1=jnp.zeros((L, T, 1), jnp.float32),              # column bias
        wt2=wt2.astype(jnp.bfloat16),                       # used as W2 @ h
        bt2=jnp.zeros((L, N, 1), jnp.float32),
        g2=jnp.ones((L, 1, embed_dim), jnp.float32),
        b2=jnp.zeros((L, 1, embed_dim), jnp.float32),
        wc1_t=jnp.transpose(wc1, (0, 2, 1)).astype(jnp.bfloat16),  # [L, D, Cd]
        bc1=jnp.zeros((L, 1, Cd), jnp.float32),
        wc2_t=jnp.transpose(wc2, (0, 2, 1)).astype(jnp.bfloat16),  # [L, Cd, D]
        bc2=jnp.zeros((L, 1, embed_dim), jnp.float32),
    )

    head_w = xavier(next(keys), num_classes, embed_dim)
    return dict(
        proj_w_t=proj_w_t, proj_b=proj_b, blocks=blocks,
        norm_g=jnp.ones((1, embed_dim), jnp.float32),
        norm_b=jnp.zeros((1, embed_dim), jnp.float32),
        head_w_t=head_w.T.astype(jnp.bfloat16),             # [D, classes]
        head_b=jnp.zeros((1, num_classes), jnp.float32),
    )


# --------------------------------------------------------------------------
# pure-JAX reference (original PyTorch formulation, f32, exact-erf GELU)
# --------------------------------------------------------------------------
def mlp_mixer_reference(images, params, *, patch_size):
    B, C, H, W = images.shape
    P = patch_size
    gh, gw = H // P, W // P
    N = gh * gw
    patches = (images.reshape(B, C, gh, P, gw, P)
               .transpose(0, 2, 4, 1, 3, 5)
               .reshape(B, N, C * P * P))
    w = params["proj_w_t"].astype(jnp.float32)
    x = patches @ w + params["proj_b"]                  # [B, N, D]

    bp = params["blocks"]
    L = bp["wt1"].shape[0]
    for l in range(L):
        wt1 = bp["wt1"][l].astype(jnp.float32)          # [T, N]
        wt2 = bp["wt2"][l].astype(jnp.float32)          # [N, T]
        xn = _layernorm(x, bp["g1"][l], bp["b1"][l], 1e-6)
        xt = jnp.swapaxes(xn, 1, 2)                     # [B, D, N]
        h = _gelu_exact(xt @ wt1.T + bp["bt1"][l][:, 0])  # [B, D, T]
        y = h @ wt2.T + bp["bt2"][l][:, 0]              # [B, D, N]
        x = x + jnp.swapaxes(y, 1, 2)

        wc1_t = bp["wc1_t"][l].astype(jnp.float32)      # [D, Cd]
        wc2_t = bp["wc2_t"][l].astype(jnp.float32)      # [Cd, D]
        xn = _layernorm(x, bp["g2"][l], bp["b2"][l], 1e-6)
        h = _gelu_exact(xn @ wc1_t + bp["bc1"][l])
        x = x + (h @ wc2_t + bp["bc2"][l])

    xn = _layernorm(x, params["norm_g"], params["norm_b"], 1e-5)
    pooled = xn.mean(axis=1)
    return pooled @ params["head_w_t"].astype(jnp.float32) + params["head_b"]


# --------------------------------------------------------------------------
# main
# --------------------------------------------------------------------------
if __name__ == "__main__":
    key = jax.random.PRNGKey(0)

    B = 2
    img_size = 16
    patch_size = 4          # -> 4x4 grid, 16 tokens
    embed_dim = 32
    num_blocks = 2
    num_classes = 10

    params = init_params(key, img_size, patch_size, embed_dim, num_blocks,
                         num_classes)
    images = jax.random.normal(
        jax.random.fold_in(key, 999), (B, 3, img_size, img_size), jnp.float32
    )

    logits = mlp_mixer_forward_jit(images, params, patch_size=patch_size)
    logits = jax.block_until_ready(logits)

    assert logits.shape == (B, num_classes)
    assert bool(jnp.all(jnp.isfinite(logits)))

    # loose check vs f32 exact-GELU pure-JAX reference (kernel matmul inputs
    # are bf16, kernel GELU is the tanh approximation)
    ref = mlp_mixer_reference(images, params, patch_size=patch_size)
    assert float(jnp.max(jnp.abs(logits - ref))) < 0.25

    print("KERNEL_OK")
</pallas_src>

<mosaic_0001>
module attributes {stable_mosaic.version = 11 : i64} {
  func.func @mixer_blocks_kernel(%arg0: i32, %arg1: i32, %arg2: memref<1x16x48xbf16, #tpu.memory_space<vmem>>, %arg3: memref<48x32xbf16, #tpu.memory_space<vmem>>, %arg4: memref<1x32xf32, #tpu.memory_space<vmem>>, %arg5: memref<1x1x32xf32, #tpu.memory_space<vmem>>, %arg6: memref<1x1x32xf32, #tpu.memory_space<vmem>>, %arg7: memref<1x16x16xbf16, #tpu.memory_space<vmem>>, %arg8: memref<1x16x1xf32, #tpu.memory_space<vmem>>, %arg9: memref<1x16x16xbf16, #tpu.memory_space<vmem>>, %arg10: memref<1x16x1xf32, #tpu.memory_space<vmem>>, %arg11: memref<1x1x32xf32, #tpu.memory_space<vmem>>, %arg12: memref<1x1x32xf32, #tpu.memory_space<vmem>>, %arg13: memref<1x32x128xbf16, #tpu.memory_space<vmem>>, %arg14: memref<1x1x128xf32, #tpu.memory_space<vmem>>, %arg15: memref<1x128x32xbf16, #tpu.memory_space<vmem>>, %arg16: memref<1x1x32xf32, #tpu.memory_space<vmem>>, %arg17: memref<1x16x32xf32, #tpu.memory_space<vmem>>) attributes {dimension_semantics = [#tpu.dimension_semantics<parallel>, #tpu.dimension_semantics<arbitrary>], iteration_bounds = array<i64: 2, 2>, scalar_prefetch = 0 : i64, scratch_operands = 0 : i64, tpu.core_type = #tpu.core_type<tc>, window_params = [{transform_indices = @transform_0, window_bounds = array<i64: 1, 16, 48>}, {pipeline_mode = #tpu.pipeline_mode<synchronous>, transform_indices = @transform_1, window_bounds = array<i64: 48, 32>}, {pipeline_mode = #tpu.pipeline_mode<synchronous>, transform_indices = @transform_2, window_bounds = array<i64: 1, 32>}, {transform_indices = @transform_3, window_bounds = array<i64: 1, 1, 32>}, {transform_indices = @transform_4, window_bounds = array<i64: 1, 1, 32>}, {transform_indices = @transform_5, window_bounds = array<i64: 1, 16, 16>}, {transform_indices = @transform_6, window_bounds = array<i64: 1, 16, 1>}, {transform_indices = @transform_7, window_bounds = array<i64: 1, 16, 16>}, {transform_indices = @transform_8, window_bounds = array<i64: 1, 16, 1>}, {transform_indices = @transform_9, window_bounds = array<i64: 1, 1, 32>}, {transform_indices = @transform_10, window_bounds = array<i64: 1, 1, 32>}, {transform_indices = @transform_11, window_bounds = array<i64: 1, 32, 128>}, {transform_indices = @transform_12, window_bounds = array<i64: 1, 1, 128>}, {transform_indices = @transform_13, window_bounds = array<i64: 1, 128, 32>}, {transform_indices = @transform_14, window_bounds = array<i64: 1, 1, 32>}, {transform_indices = @transform_15, window_bounds = array<i64: 1, 16, 32>}]} {
    %c0_i32 = arith.constant 0 : i32
    %0 = arith.cmpi eq, %arg1, %c0_i32 : i32
    %1 = arith.extui %0 : i1 to i32
    %c0_i32_0 = arith.constant 0 : i32
    %2 = arith.cmpi ne, %1, %c0_i32_0 : i32
    scf.if %2 {
      %c0_63 = arith.constant 0 : index
      %c0_64 = arith.constant 0 : index
      %116 = vector.load %arg3[%c0_63, %c0_64] : memref<48x32xbf16, #tpu.memory_space<vmem>>, vector<48x32xbf16>
      %c0_65 = arith.constant 0 : index
      %c0_66 = arith.constant 0 : index
      %117 = vector.load %arg4[%c0_65, %c0_66] : memref<1x32xf32, #tpu.memory_space<vmem>>, vector<1x32xf32>
      %c0_67 = arith.constant 0 : index
      %c0_68 = arith.constant 0 : index
      %c0_69 = arith.constant 0 : index
      %118 = vector.load %arg2[%c0_67, %c0_68, %c0_69] : memref<1x16x48xbf16, #tpu.memory_space<vmem>>, vector<1x16x48xbf16>
      %119 = vector.shape_cast %118 : vector<1x16x48xbf16> to vector<16x48xbf16>
      %cst_70 = arith.constant dense<0.000000e+00> : vector<16x32xf32>
      %120 = tpu.matmul %119, %116, %cst_70 {dimension_numbers = #tpu.dot_dimension_numbers<[1], [0], [0], [1], [0, 0, 1, 1], [], []>} : vector<16x48xbf16>, vector<48x32xbf16>, vector<16x32xf32> -> vector<16x32xf32>
      %121 = vector.broadcast %117 : vector<1x32xf32> to vector<16x32xf32>
      %122 = arith.addf %120, %121 : vector<16x32xf32>
      %c0_71 = arith.constant 0 : index
      %c0_72 = arith.constant 0 : index
      %c0_73 = arith.constant 0 : index
      %123 = vector.load %arg17[%c0_71, %c0_72, %c0_73] : memref<1x16x32xf32, #tpu.memory_space<vmem>>, vector<1x16x32xf32>
      %124 = vector.shape_cast %123 : vector<1x16x32xf32> to vector<16x32xf32>
      %125 = vector.shape_cast %122 : vector<16x32xf32> to vector<1x16x32xf32>
      tpu.vector_store %arg17[%c0_71, %c0_72, %c0_73], %125 {strides = array<i32>} : memref<1x16x32xf32, #tpu.memory_space<vmem>>, vector<1x16x32xf32>,
    } else {
    }
    %c0 = arith.constant 0 : index
    %c0_1 = arith.constant 0 : index
    %c0_2 = arith.constant 0 : index
    %3 = vector.load %arg5[%c0, %c0_1, %c0_2] : memref<1x1x32xf32, #tpu.memory_space<vmem>>, vector<1x1x32xf32>
    %4 = vector.shape_cast %3 : vector<1x1x32xf32> to vector<1x32xf32>
    %c0_3 = arith.constant 0 : index
    %c0_4 = arith.constant 0 : index
    %c0_5 = arith.constant 0 : index
    %5 = vector.load %arg6[%c0_3, %c0_4, %c0_5] : memref<1x1x32xf32, #tpu.memory_space<vmem>>, vector<1x1x32xf32>
    %6 = vector.shape_cast %5 : vector<1x1x32xf32> to vector<1x32xf32>
    %c0_6 = arith.constant 0 : index
    %c0_7 = arith.constant 0 : index
    %c0_8 = arith.constant 0 : index
    %7 = vector.load %arg7[%c0_6, %c0_7, %c0_8] : memref<1x16x16xbf16, #tpu.memory_space<vmem>>, vector<1x16x16xbf16>
    %8 = vector.shape_cast %7 : vector<1x16x16xbf16> to vector<16x16xbf16>
    %c0_9 = arith.constant 0 : index
    %c0_10 = arith.constant 0 : index
    %c0_11 = arith.constant 0 : index
    %9 = vector.load %arg8[%c0_9, %c0_10, %c0_11] : memref<1x16x1xf32, #tpu.memory_space<vmem>>, vector<1x16x1xf32>
    %10 = vector.shape_cast %9 : vector<1x16x1xf32> to vector<16x1xf32>
    %c0_12 = arith.constant 0 : index
    %c0_13 = arith.constant 0 : index
    %c0_14 = arith.constant 0 : index
    %11 = vector.load %arg9[%c0_12, %c0_13, %c0_14] : memref<1x16x16xbf16, #tpu.memory_space<vmem>>, vector<1x16x16xbf16>
    %12 = vector.shape_cast %11 : vector<1x16x16xbf16> to vector<16x16xbf16>
    %c0_15 = arith.constant 0 : index
    %c0_16 = arith.constant 0 : index
    %c0_17 = arith.constant 0 : index
    %13 = vector.load %arg10[%c0_15, %c0_16, %c0_17] : memref<1x16x1xf32, #tpu.memory_space<vmem>>, vector<1x16x1xf32>
    %14 = vector.shape_cast %13 : vector<1x16x1xf32> to vector<16x1xf32>
    %c0_18 = arith.constant 0 : index
    %c0_19 = arith.constant 0 : index
    %c0_20 = arith.constant 0 : index
    %15 = vector.load %arg11[%c0_18, %c0_19, %c0_20] : memref<1x1x32xf32, #tpu.memory_space<vmem>>, vector<1x1x32xf32>
    %16 = vector.shape_cast %15 : vector<1x1x32xf32> to vector<1x32xf32>
    %c0_21 = arith.constant 0 : index
    %c0_22 = arith.constant 0 : index
    %c0_23 = arith.constant 0 : index
    %17 = vector.load %arg12[%c0_21, %c0_22, %c0_23] : memref<1x1x32xf32, #tpu.memory_space<vmem>>, vector<1x1x32xf32>
    %18 = vector.shape_cast %17 : vector<1x1x32xf32> to vector<1x32xf32>
    %c0_24 = arith.constant 0 : index
    %c0_25 = arith.constant 0 : index
    %c0_26 = arith.constant 0 : index
    %19 = vector.load %arg13[%c0_24, %c0_25, %c0_26] : memref<1x32x128xbf16, #tpu.memory_space<vmem>>, vector<1x32x128xbf16>
    %20 = vector.shape_cast %19 : vector<1x32x128xbf16> to vector<32x128xbf16>
    %c0_27 = arith.constant 0 : index
    %c0_28 = arith.constant 0 : index
    %c0_29 = arith.constant 0 : index
    %21 = vector.load %arg14[%c0_27, %c0_28, %c0_29] : memref<1x1x128xf32, #tpu.memory_space<vmem>>, vector<1x1x128xf32>
    %22 = vector.shape_cast %21 : vector<1x1x128xf32> to vector<1x128xf32>
    %c0_30 = arith.constant 0 : index
    %c0_31 = arith.constant 0 : index
    %c0_32 = arith.constant 0 : index
    %23 = vector.load %arg15[%c0_30, %c0_31, %c0_32] : memref<1x128x32xbf16, #tpu.memory_space<vmem>>, vector<1x128x32xbf16>
    %24 = vector.shape_cast %23 : vector<1x128x32xbf16> to vector<128x32xbf16>
    %c0_33 = arith.constant 0 : index
    %c0_34 = arith.constant 0 : index
    %c0_35 = arith.constant 0 : index
    %25 = vector.load %arg16[%c0_33, %c0_34, %c0_35] : memref<1x1x32xf32, #tpu.memory_space<vmem>>, vector<1x1x32xf32>
    %26 = vector.shape_cast %25 : vector<1x1x32xf32> to vector<1x32xf32>
    %c0_36 = arith.constant 0 : index
    %c0_37 = arith.constant 0 : index
    %c0_38 = arith.constant 0 : index
    %27 = vector.load %arg17[%c0_36, %c0_37, %c0_38] : memref<1x16x32xf32, #tpu.memory_space<vmem>>, vector<1x16x32xf32>
    %28 = vector.shape_cast %27 : vector<1x16x32xf32> to vector<16x32xf32>
    %cst = arith.constant dense<0.000000e+00> : vector<16xf32>
    %29 = vector.multi_reduction <add>, %28, %cst [1] : vector<16x32xf32> to vector<16xf32>
    %30 = vector.shape_cast %29 : vector<16xf32> to vector<16x1xf32>
    %cst_39 = arith.constant 3.200000e+01 : f32
    %31 = vector.broadcast %cst_39 : f32 to vector<16x1xf32>
    %32 = arith.divf %30, %31 : vector<16x1xf32>
    %33 = vector.broadcast %32 : vector<16x1xf32> to vector<16x32xf32>
    %34 = arith.subf %28, %33 : vector<16x32xf32>
    %35 = arith.mulf %34, %34 : vector<16x32xf32>
    %cst_40 = arith.constant dense<0.000000e+00> : vector<16xf32>
    %36 = vector.multi_reduction <add>, %35, %cst_40 [1] : vector<16x32xf32> to vector<16xf32>
    %37 = vector.shape_cast %36 : vector<16xf32> to vector<16x1xf32>
    %cst_41 = arith.constant 3.200000e+01 : f32
    %38 = vector.broadcast %cst_41 : f32 to vector<16x1xf32>
    %39 = arith.divf %37, %38 : vector<16x1xf32>
    %cst_42 = arith.constant 9.99999997E-7 : f32
    %40 = vector.broadcast %cst_42 : f32 to vector<16x1xf32>
    %41 = arith.addf %39, %40 : vector<16x1xf32>
    %42 = math.rsqrt %41 : vector<16x1xf32>
    %43 = vector.broadcast %42 : vector<16x1xf32> to vector<16x32xf32>
    %44 = arith.mulf %34, %43 : vector<16x32xf32>
    %45 = vector.broadcast %4 : vector<1x32xf32> to vector<16x32xf32>
    %46 = arith.mulf %44, %45 : vector<16x32xf32>
    %47 = vector.broadcast %6 : vector<1x32xf32> to vector<16x32xf32>
    %48 = arith.addf %46, %47 : vector<16x32xf32>
    %49 = arith.truncf %48 : vector<16x32xf32> to vector<16x32xbf16>
    %cst_43 = arith.constant dense<0.000000e+00> : vector<16x32xf32>
    %50 = tpu.matmul %8, %49, %cst_43 {dimension_numbers = #tpu.dot_dimension_numbers<[1], [0], [0], [1], [0, 0, 1, 1], [], []>} : vector<16x16xbf16>, vector<16x32xbf16>, vector<16x32xf32> -> vector<16x32xf32>
    %51 = vector.broadcast %10 : vector<16x1xf32> to vector<16x32xf32>
    %52 = arith.addf %50, %51 : vector<16x32xf32>
    %cst_44 = arith.constant 5.000000e-01 : f32
    %53 = vector.broadcast %cst_44 : f32 to vector<16x32xf32>
    %54 = arith.mulf %53, %52 : vector<16x32xf32>
    %55 = arith.mulf %52, %52 : vector<16x32xf32>
    %56 = arith.mulf %55, %52 : vector<16x32xf32>
    %cst_45 = arith.constant 4.471500e-02 : f32
    %57 = vector.broadcast %cst_45 : f32 to vector<16x32xf32>
    %58 = arith.mulf %57, %56 : vector<16x32xf32>
    %59 = arith.addf %52, %58 : vector<16x32xf32>
    %cst_46 = arith.constant 0.797884583 : f32
    %60 = vector.broadcast %cst_46 : f32 to vector<16x32xf32>
    %61 = arith.mulf %60, %59 : vector<16x32xf32>
    %62 = math.tanh %61 : vector<16x32xf32>
    %cst_47 = arith.constant 1.000000e+00 : f32
    %63 = vector.broadcast %cst_47 : f32 to vector<16x32xf32>
    %64 = arith.addf %63, %62 : vector<16x32xf32>
    %65 = arith.mulf %54, %64 : vector<16x32xf32>
    %66 = arith.truncf %65 : vector<16x32xf32> to vector<16x32xbf16>
    %cst_48 = arith.constant dense<0.000000e+00> : vector<16x32xf32>
    %67 = tpu.matmul %12, %66, %cst_48 {dimension_numbers = #tpu.dot_dimension_numbers<[1], [0], [0], [1], [0, 0, 1, 1], [], []>} : vector<16x16xbf16>, vector<16x32xbf16>, vector<16x32xf32> -> vector<16x32xf32>
    %68 = vector.broadcast %14 : vector<16x1xf32> to vector<16x32xf32>
    %69 = arith.addf %67, %68 : vector<16x32xf32>
    %70 = arith.addf %28, %69 : vector<16x32xf32>
    %cst_49 = arith.constant dense<0.000000e+00> : vector<16xf32>
    %71 = vector.multi_reduction <add>, %70, %cst_49 [1] : vector<16x32xf32> to vector<16xf32>
    %72 = vector.shape_cast %71 : vector<16xf32> to vector<16x1xf32>
    %cst_50 = arith.constant 3.200000e+01 : f32
    %73 = vector.broadcast %cst_50 : f32 to vector<16x1xf32>
    %74 = arith.divf %72, %73 : vector<16x1xf32>
    %75 = vector.broadcast %74 : vector<16x1xf32> to vector<16x32xf32>
    %76 = arith.subf %70, %75 : vector<16x32xf32>
    %77 = arith.mulf %76, %76 : vector<16x32xf32>
    %cst_51 = arith.constant dense<0.000000e+00> : vector<16xf32>
    %78 = vector.multi_reduction <add>, %77, %cst_51 [1] : vector<16x32xf32> to vector<16xf32>
    %79 = vector.shape_cast %78 : vector<16xf32> to vector<16x1xf32>
    %cst_52 = arith.constant 3.200000e+01 : f32
    %80 = vector.broadcast %cst_52 : f32 to vector<16x1xf32>
    %81 = arith.divf %79, %80 : vector<16x1xf32>
    %cst_53 = arith.constant 9.99999997E-7 : f32
    %82 = vector.broadcast %cst_53 : f32 to vector<16x1xf32>
    %83 = arith.addf %81, %82 : vector<16x1xf32>
    %84 = math.rsqrt %83 : vector<16x1xf32>
    %85 = vector.broadcast %84 : vector<16x1xf32> to vector<16x32xf32>
    %86 = arith.mulf %76, %85 : vector<16x32xf32>
    %87 = vector.broadcast %16 : vector<1x32xf32> to vector<16x32xf32>
    %88 = arith.mulf %86, %87 : vector<16x32xf32>
    %89 = vector.broadcast %18 : vector<1x32xf32> to vector<16x32xf32>
    %90 = arith.addf %88, %89 : vector<16x32xf32>
    %91 = arith.truncf %90 : vector<16x32xf32> to vector<16x32xbf16>
    %cst_54 = arith.constant dense<0.000000e+00> : vector<16x128xf32>
    %92 = tpu.matmul %91, %20, %cst_54 {dimension_numbers = #tpu.dot_dimension_numbers<[1], [0], [0], [1], [0, 0, 1, 1], [], []>} : vector<16x32xbf16>, vector<32x128xbf16>, vector<16x128xf32> -> vector<16x128xf32>
    %93 = vector.broadcast %22 : vector<1x128xf32> to vector<16x128xf32>
    %94 = arith.addf %92, %93 : vector<16x128xf32>
    %cst_55 = arith.constant 5.000000e-01 : f32
    %95 = vector.broadcast %cst_55 : f32 to vector<16x128xf32>
    %96 = arith.mulf %95, %94 : vector<16x128xf32>
    %97 = arith.mulf %94, %94 : vector<16x128xf32>
    %98 = arith.mulf %97, %94 : vector<16x128xf32>
    %cst_56 = arith.constant 4.471500e-02 : f32
    %99 = vector.broadcast %cst_56 : f32 to vector<16x128xf32>
    %100 = arith.mulf %99, %98 : vector<16x128xf32>
    %101 = arith.addf %94, %100 : vector<16x128xf32>
    %cst_57 = arith.constant 0.797884583 : f32
    %102 = vector.broadcast %cst_57 : f32 to vector<16x128xf32>
    %103 = arith.mulf %102, %101 : vector<16x128xf32>
    %104 = math.tanh %103 : vector<16x128xf32>
    %cst_58 = arith.constant 1.000000e+00 : f32
    %105 = vector.broadcast %cst_58 : f32 to vector<16x128xf32>
    %106 = arith.addf %105, %104 : vector<16x128xf32>
    %107 = arith.mulf %96, %106 : vector<16x128xf32>
    %108 = arith.truncf %107 : vector<16x128xf32> to vector<16x128xbf16>
    %cst_59 = arith.constant dense<0.000000e+00> : vector<16x32xf32>
    %109 = tpu.matmul %108, %24, %cst_59 {dimension_numbers = #tpu.dot_dimension_numbers<[1], [0], [0], [1], [0, 0, 1, 1], [], []>} : vector<16x128xbf16>, vector<128x32xbf16>, vector<16x32xf32> -> vector<16x32xf32>
    %110 = vector.broadcast %26 : vector<1x32xf32> to vector<16x32xf32>
    %111 = arith.addf %109, %110 : vector<16x32xf32>
    %112 = arith.addf %70, %111 : vector<16x32xf32>
    %c0_60 = arith.constant 0 : index
    %c0_61 = arith.constant 0 : index
    %c0_62 = arith.constant 0 : index
    %113 = vector.load %arg17[%c0_60, %c0_61, %c0_62] : memref<1x16x32xf32, #tpu.memory_space<vmem>>, vector<1x16x32xf32>
    %114 = vector.shape_cast %113 : vector<1x16x32xf32> to vector<16x32xf32>
    %115 = vector.shape_cast %112 : vector<16x32xf32> to vector<1x16x32xf32>
    tpu.vector_store %arg17[%c0_60, %c0_61, %c0_62], %115 {strides = array<i32>} : memref<1x16x32xf32, #tpu.memory_space<vmem>>, vector<1x16x32xf32>,
    return
  }
  func.func @transform_0(%arg0: i32, %arg1: i32) -> (i32, i32, i32) {
    %c0_i32 = arith.constant 0 : i32
    %c0_i32_0 = arith.constant 0 : i32
    %c0_i32_1 = arith.constant 0 : i32
    return %arg0, %c0_i32, %c0_i32_0 : i32, i32, i32
  }
  func.func @transform_1(%arg0: i32, %arg1: i32) -> (i32, i32) {
    %c0_i32 = arith.constant 0 : i32
    %c0_i32_0 = arith.constant 0 : i32
    %c0_i32_1 = arith.constant 0 : i32
    return %c0_i32, %c0_i32_0 : i32, i32
  }
  func.func @transform_2(%arg0: i32, %arg1: i32) -> (i32, i32) {
    %c0_i32 = arith.constant 0 : i32
    %c0_i32_0 = arith.constant 0 : i32
    %c0_i32_1 = arith.constant 0 : i32
    return %c0_i32, %c0_i32_0 : i32, i32
  }
  func.func @transform_3(%arg0: i32, %arg1: i32) -> (i32, i32, i32) {
    %c0_i32 = arith.constant 0 : i32
    %c0_i32_0 = arith.constant 0 : i32
    %c0_i32_1 = arith.constant 0 : i32
    return %arg1, %c0_i32, %c0_i32_0 : i32, i32, i32
  }
  func.func @transform_4(%arg0: i32, %arg1: i32) -> (i32, i32, i32) {
    %c0_i32 = arith.constant 0 : i32
    %c0_i32_0 = arith.constant 0 : i32
    %c0_i32_1 = arith.constant 0 : i32
    return %arg1, %c0_i32, %c0_i32_0 : i32, i32, i32
  }
  func.func @transform_5(%arg0: i32, %arg1: i32) -> (i32, i32, i32) {
    %c0_i32 = arith.constant 0 : i32
    %c0_i32_0 = arith.constant 0 : i32
    %c0_i32_1 = arith.constant 0 : i32
    return %arg1, %c0_i32, %c0_i32_0 : i32, i32, i32
  }
  func.func @transform_6(%arg0: i32, %arg1: i32) -> (i32, i32, i32) {
    %c0_i32 = arith.constant 0 : i32
    %c0_i32_0 = arith.constant 0 : i32
    %c0_i32_1 = arith.constant 0 : i32
    return %arg1, %c0_i32, %c0_i32_0 : i32, i32, i32
  }
  func.func @transform_7(%arg0: i32, %arg1: i32) -> (i32, i32, i32) {
    %c0_i32 = arith.constant 0 : i32
    %c0_i32_0 = arith.constant 0 : i32
    %c0_i32_1 = arith.constant 0 : i32
    return %arg1, %c0_i32, %c0_i32_0 : i32, i32, i32
  }
  func.func @transform_8(%arg0: i32, %arg1: i32) -> (i32, i32, i32) {
    %c0_i32 = arith.constant 0 : i32
    %c0_i32_0 = arith.constant 0 : i32
    %c0_i32_1 = arith.constant 0 : i32
    return %arg1, %c0_i32, %c0_i32_0 : i32, i32, i32
  }
  func.func @transform_9(%arg0: i32, %arg1: i32) -> (i32, i32, i32) {
    %c0_i32 = arith.constant 0 : i32
    %c0_i32_0 = arith.constant 0 : i32
    %c0_i32_1 = arith.constant 0 : i32
    return %arg1, %c0_i32, %c0_i32_0 : i32, i32, i32
  }
  func.func @transform_10(%arg0: i32, %arg1: i32) -> (i32, i32, i32) {
    %c0_i32 = arith.constant 0 : i32
    %c0_i32_0 = arith.constant 0 : i32
    %c0_i32_1 = arith.constant 0 : i32
    return %arg1, %c0_i32, %c0_i32_0 : i32, i32, i32
  }
  func.func @transform_11(%arg0: i32, %arg1: i32) -> (i32, i32, i32) {
    %c0_i32 = arith.constant 0 : i32
    %c0_i32_0 = arith.constant 0 : i32
    %c0_i32_1 = arith.constant 0 : i32
    return %arg1, %c0_i32, %c0_i32_0 : i32, i32, i32
  }
  func.func @transform_12(%arg0: i32, %arg1: i32) -> (i32, i32, i32) {
    %c0_i32 = arith.constant 0 : i32
    %c0_i32_0 = arith.constant 0 : i32
    %c0_i32_1 = arith.constant 0 : i32
    return %arg1, %c0_i32, %c0_i32_0 : i32, i32, i32
  }
  func.func @transform_13(%arg0: i32, %arg1: i32) -> (i32, i32, i32) {
    %c0_i32 = arith.constant 0 : i32
    %c0_i32_0 = arith.constant 0 : i32
    %c0_i32_1 = arith.constant 0 : i32
    return %arg1, %c0_i32, %c0_i32_0 : i32, i32, i32
  }
  func.func @transform_14(%arg0: i32, %arg1: i32) -> (i32, i32, i32) {
    %c0_i32 = arith.constant 0 : i32
    %c0_i32_0 = arith.constant 0 : i32
    %c0_i32_1 = arith.constant 0 : i32
    return %arg1, %c0_i32, %c0_i32_0 : i32, i32, i32
  }
  func.func @transform_15(%arg0: i32, %arg1: i32) -> (i32, i32, i32) {
    %c0_i32 = arith.constant 0 : i32
    %c0_i32_0 = arith.constant 0 : i32
    %c0_i32_1 = arith.constant 0 : i32
    return %arg0, %c0_i32, %c0_i32_0 : i32, i32, i32
  }
}

module attributes {stable_mosaic.version = 11 : i64} {
  func.func @head_kernel(%arg0: i32, %arg1: memref<2x16x32xf32, #tpu.memory_space<vmem>>, %arg2: memref<1x32xf32, #tpu.memory_space<vmem>>, %arg3: memref<1x32xf32, #tpu.memory_space<vmem>>, %arg4: memref<32x128xbf16, #tpu.memory_space<vmem>>, %arg5: memref<1x128xf32, #tpu.memory_space<vmem>>, %arg6: memref<2x128xf32, #tpu.memory_space<vmem>>) attributes {dimension_semantics = [#tpu.dimension_semantics<parallel>], iteration_bounds = array<i64: 1>, scalar_prefetch = 0 : i64, scratch_operands = 0 : i64, tpu.core_type = #tpu.core_type<tc>, window_params = [{transform_indices = @transform_0, window_bounds = array<i64: 2, 16, 32>}, {pipeline_mode = #tpu.pipeline_mode<synchronous>, transform_indices = @transform_1, window_bounds = array<i64: 1, 32>}, {pipeline_mode = #tpu.pipeline_mode<synchronous>, transform_indices = @transform_2, window_bounds = array<i64: 1, 32>}, {pipeline_mode = #tpu.pipeline_mode<synchronous>, transform_indices = @transform_3, window_bounds = array<i64: 32, 128>}, {pipeline_mode = #tpu.pipeline_mode<synchronous>, transform_indices = @transform_4, window_bounds = array<i64: 1, 128>}, {transform_indices = @transform_5, window_bounds = array<i64: 2, 128>}]} {
    %c0 = arith.constant 0 : index
    %c0_0 = arith.constant 0 : index
    %c0_1 = arith.constant 0 : index
    %0 = vector.load %arg1[%c0, %c0_0, %c0_1] : memref<2x16x32xf32, #tpu.memory_space<vmem>>, vector<2x16x32xf32>
    %c0_2 = arith.constant 0 : index
    %c0_3 = arith.constant 0 : index
    %1 = vector.load %arg2[%c0_2, %c0_3] : memref<1x32xf32, #tpu.memory_space<vmem>>, vector<1x32xf32>
    %c0_4 = arith.constant 0 : index
    %c0_5 = arith.constant 0 : index
    %2 = vector.load %arg3[%c0_4, %c0_5] : memref<1x32xf32, #tpu.memory_space<vmem>>, vector<1x32xf32>
    %cst = arith.constant dense<0.000000e+00> : vector<2x16xf32>
    %3 = vector.multi_reduction <add>, %0, %cst [2] : vector<2x16x32xf32> to vector<2x16xf32>
    %4 = vector.shape_cast %3 : vector<2x16xf32> to vector<2x16x1xf32>
    %cst_6 = arith.constant 3.200000e+01 : f32
    %5 = vector.broadcast %cst_6 : f32 to vector<2x16x1xf32>
    %6 = arith.divf %4, %5 : vector<2x16x1xf32>
    %7 = vector.broadcast %6 : vector<2x16x1xf32> to vector<2x16x32xf32>
    %8 = arith.subf %0, %7 : vector<2x16x32xf32>
    %9 = arith.mulf %8, %8 : vector<2x16x32xf32>
    %cst_7 = arith.constant dense<0.000000e+00> : vector<2x16xf32>
    %10 = vector.multi_reduction <add>, %9, %cst_7 [2] : vector<2x16x32xf32> to vector<2x16xf32>
    %11 = vector.shape_cast %10 : vector<2x16xf32> to vector<2x16x1xf32>
    %cst_8 = arith.constant 3.200000e+01 : f32
    %12 = vector.broadcast %cst_8 : f32 to vector<2x16x1xf32>
    %13 = arith.divf %11, %12 : vector<2x16x1xf32>
    %cst_9 = arith.constant 9.99999974E-6 : f32
    %14 = vector.broadcast %cst_9 : f32 to vector<2x16x1xf32>
    %15 = arith.addf %13, %14 : vector<2x16x1xf32>
    %16 = math.rsqrt %15 : vector<2x16x1xf32>
    %17 = vector.broadcast %16 : vector<2x16x1xf32> to vector<2x16x32xf32>
    %18 = arith.mulf %8, %17 : vector<2x16x32xf32>
    %19 = vector.shape_cast %1 : vector<1x32xf32> to vector<1x1x32xf32>
    %20 = vector.broadcast %19 : vector<1x1x32xf32> to vector<2x16x32xf32>
    %21 = arith.mulf %18, %20 : vector<2x16x32xf32>
    %22 = vector.shape_cast %2 : vector<1x32xf32> to vector<1x1x32xf32>
    %23 = vector.broadcast %22 : vector<1x1x32xf32> to vector<2x16x32xf32>
    %24 = arith.addf %21, %23 : vector<2x16x32xf32>
    %cst_10 = arith.constant dense<0.000000e+00> : vector<2x32xf32>
    %25 = vector.multi_reduction <add>, %24, %cst_10 [1] : vector<2x16x32xf32> to vector<2x32xf32>
    %cst_11 = arith.constant 1.600000e+01 : f32
    %26 = vector.broadcast %cst_11 : f32 to vector<2x32xf32>
    %27 = arith.divf %25, %26 : vector<2x32xf32>
    %28 = arith.truncf %27 : vector<2x32xf32> to vector<2x32xbf16>
    %c0_12 = arith.constant 0 : index
    %c0_13 = arith.constant 0 : index
    %29 = vector.load %arg4[%c0_12, %c0_13] : memref<32x128xbf16, #tpu.memory_space<vmem>>, vector<32x128xbf16>
    %cst_14 = arith.constant dense<0.000000e+00> : vector<2x128xf32>
    %30 = tpu.matmul %28, %29, %cst_14 {dimension_numbers = #tpu.dot_dimension_numbers<[1], [0], [0], [1], [0, 0, 1, 1], [], []>} : vector<2x32xbf16>, vector<32x128xbf16>, vector<2x128xf32> -> vector<2x128xf32>
    %c0_15 = arith.constant 0 : index
    %c0_16 = arith.constant 0 : index
    %31 = vector.load %arg5[%c0_15, %c0_16] : memref<1x128xf32, #tpu.memory_space<vmem>>, vector<1x128xf32>
    %32 = vector.broadcast %31 : vector<1x128xf32> to vector<2x128xf32>
    %33 = arith.addf %30, %32 : vector<2x128xf32>
    %c0_17 = arith.constant 0 : index
    %c0_18 = arith.constant 0 : index
    %34 = vector.load %arg6[%c0_17, %c0_18] : memref<2x128xf32, #tpu.memory_space<vmem>>, vector<2x128xf32>
    tpu.vector_store %arg6[%c0_17, %c0_18], %33 {strides = array<i32>} : memref<2x128xf32, #tpu.memory_space<vmem>>, vector<2x128xf32>,
    return
  }
  func.func @transform_0(%arg0: i32) -> (i32, i32, i32) {
    %c0_i32 = arith.constant 0 : i32
    %c0_i32_0 = arith.constant 0 : i32
    %c0_i32_1 = arith.constant 0 : i32
    return %arg0, %c0_i32, %c0_i32_0 : i32, i32, i32
  }
  func.func @transform_1(%arg0: i32) -> (i32, i32) {
    %c0_i32 = arith.constant 0 : i32
    %c0_i32_0 = arith.constant 0 : i32
    %c0_i32_1 = arith.constant 0 : i32
    return %c0_i32, %c0_i32_0 : i32, i32
  }
  func.func @transform_2(%arg0: i32) -> (i32, i32) {
    %c0_i32 = arith.constant 0 : i32
    %c0_i32_0 = arith.constant 0 : i32
    %c0_i32_1 = arith.constant 0 : i32
    return %c0_i32, %c0_i32_0 : i32, i32
  }
  func.func @transform_3(%arg0: i32) -> (i32, i32) {
    %c0_i32 = arith.constant 0 : i32
    %c0_i32_0 = arith.constant 0 : i32
    %c0_i32_1 = arith.constant 0 : i32
    return %c0_i32, %c0_i32_0 : i32, i32
  }
  func.func @transform_4(%arg0: i32) -> (i32, i32) {
    %c0_i32 = arith.constant 0 : i32
    %c0_i32_0 = arith.constant 0 : i32
    %c0_i32_1 = arith.constant 0 : i32
    return %c0_i32, %c0_i32_0 : i32, i32
  }
  func.func @transform_5(%arg0: i32) -> (i32, i32) {
    %c0_i32 = arith.constant 0 : i32
    %c0_i32_0 = arith.constant 0 : i32
    return %arg0, %c0_i32 : i32, i32
  }
}

</mosaic_0001>

<llo_original>
// kernel: mlp_mixer_forward.3
$region0: #{mlp_mixer_forward.3}
  #allocation0 [shape = 'u32[]', space=smem, size = 0x4, offset = 0x4, fixed_abs, tag = 'smem constant byte address 0x4 - core index']
  #allocation1 [shape = 'u32[72,128]{1,0:T(1,128)}', space=vmem, size = 0x9000, scoped, tag = 'internal scratch']
  %s0 = inlined_call_operand.vmem [shape: f32[2,16,32], index: 0, kind: input, shape index: {}]
  %s1 = inlined_call_operand.vmem [shape: f32[1,32], index: 1, kind: input, shape index: {}]
  %s2 = inlined_call_operand.vmem [shape: f32[1,32], index: 2, kind: input, shape index: {}]
  %s3 = inlined_call_operand.vmem [shape: bf16[32,128], index: 3, kind: input, shape index: {}]
  %s4 = inlined_call_operand.vmem [shape: f32[1,128], index: 4, kind: input, shape index: {}]
  %s5 = inlined_call_operand.hbm [shape: f32[2,128], index: 5, kind: output, shape index: {}]
  %s6 = sld [smem:[#allocation0]]
  $region30: #{mlp_mixer_forward.3} parent=0
    _
  %s8 = ssub.s32 1, %s6
  %s9 = scalar_select 0, %s8, %s6
  $region1: #{mlp_mixer_forward.3} parent=0
    #allocation2 [shape = 'u8[1024]{0}', space=vmem, size = 0x400, scoped, tag = 'output window, operand 0, single buffered']
    #allocation3 [shape = 's32[1]{0}', space=sflag, size = 0x4, scoped, tag = 'scoped memory for mlp_mixer_forward.3']
    %10 = vsyncpa [#allocation3], 0
    // Predicated region
    $region2: #{mlp_mixer_forward.3} parent=1 // pred_check
      _
    $region3: #{mlp_mixer_forward.3} parent=1 // pred_check_branch
      %12 = sbr.rel (0) target = $region5
    $region4: #{mlp_mixer_forward.3} parent=1 // pred_region
      _
    $region5: #{mlp_mixer_forward.3} parent=1 // pred_fallthru
      _
    // Predicated region
    $region6: #{mlp_mixer_forward.3} parent=1 // pred_check
      _
    $region7: #{mlp_mixer_forward.3} parent=1 // pred_check_branch
      %14 = sbr.rel (0) target = $region9
    $region8: #{mlp_mixer_forward.3} parent=1 // pred_region
      _
    $region9: #{mlp_mixer_forward.3} parent=1 // pred_fallthru
      _
    // Predicated region
    $region10: #{mlp_mixer_forward.3} parent=1 // pred_check
      _
    $region11: #{mlp_mixer_forward.3} parent=1 // pred_check_branch
      %16 = sbr.rel (0) target = $region13
    $region12: #{mlp_mixer_forward.3} parent=1 // pred_region
      _
    $region13: #{mlp_mixer_forward.3} parent=1 // pred_fallthru
      _
    // Predicated region
    $region14: #{mlp_mixer_forward.3} parent=1 // pred_check
      _
    $region15: #{mlp_mixer_forward.3} parent=1 // pred_check_branch
      %18 = sbr.rel (0) target = $region17
    $region16: #{mlp_mixer_forward.3} parent=1 // pred_region
      _
    $region17: #{mlp_mixer_forward.3} parent=1 // pred_fallthru
      _
    // Predicated region
    $region18: #{mlp_mixer_forward.3} parent=1 // pred_check
      _
    $region19: #{mlp_mixer_forward.3} parent=1 // pred_check_branch
      %20 = sbr.rel (0) target = $region21
    $region20: #{mlp_mixer_forward.3} parent=1 // pred_region
      _
    $region21: #{mlp_mixer_forward.3} parent=1 // pred_fallthru
      _
    %v22 = vld [vmem:[%s0] sm:$0xff]
    %v23 = vld [vmem:[%s0 + $0x8] sm:$0xff]
    %v24 = vld [vmem:[%s0 + $0x10] sm:$0xff]
    %v25 = vld [vmem:[%s0 + $0x18] sm:$0xff]
    %v26 = vld [vmem:[%s1] sm:$0x1]
    %v27 = vld [vmem:[%s2] sm:$0x1]
    %vm28 = vcmask 261120
    %v29 = vsel %vm28, %v22, 0.0
    %30 = vadd.xlane.f32.xlu0 %v29
    %v31 = vpop.xlane.xlu0 %30
    %v32 = vsel %vm28, %v23, 0.0
    %33 = vadd.xlane.f32.xlu0 %v32
    %v34 = vpop.xlane.xlu0 %33
    %v35 = vsel %vm28, %v24, 0.0
    %36 = vadd.xlane.f32.xlu0 %v35
    %v37 = vpop.xlane.xlu0 %36
    %v38 = vsel %vm28, %v25, 0.0
    %39 = vadd.xlane.f32.xlu0 %v38
    %v40 = vpop.xlane.xlu0 %39
    %v41 = vrcp.pop 32.0
    %v42 = vmul.f32 32.0, %v41
    %v43 = vsub.f32 1.0, %v42
    %v44 = vmul.f32 %v41, %v43
    %v45 = vadd.f32 %v41, %v44
    %vm46 = vweird.f32 %v41
    %v47 = vsel %vm46, %v41, %v45
    %v48 = vmul.f32 %v31, %v47
    %v49 = vmul.f32 %v34, %v47
    %v50 = vmul.f32 %v37, %v47
    %v51 = vmul.f32 %v40, %v47
    %v52 = vsub.f32 %v22, %v48
    %v53 = vsub.f32 %v23, %v49
    %v54 = vsub.f32 %v24, %v50
    %v55 = vsub.f32 %v25, %v51
    %v56 = vmul.f32 %v52, %v52
    %v57 = vmul.f32 %v53, %v53
    %v58 = vmul.f32 %v54, %v54
    %v59 = vmul.f32 %v55, %v55
    %v60 = vsel %vm28, %v56, 0.0
    %61 = vadd.xlane.f32.xlu0 %v60
    %v62 = vpop.xlane.xlu0 %61
    %v63 = vsel %vm28, %v57, 0.0
    %64 = vadd.xlane.f32.xlu0 %v63
    %v65 = vpop.xlane.xlu0 %64
    %v66 = vsel %vm28, %v58, 0.0
    %67 = vadd.xlane.f32.xlu0 %v66
    %v68 = vpop.xlane.xlu0 %67
    %v69 = vsel %vm28, %v59, 0.0
    %70 = vadd.xlane.f32.xlu0 %v69
    %v71 = vpop.xlane.xlu0 %70
    %v72 = vmul.f32 %v62, %v47
    %v73 = vmul.f32 %v65, %v47
    %v74 = vmul.f32 %v68, %v47
    %v75 = vmul.f32 %v71, %v47
    %v76 = vadd.f32 %v72, 1e-05
    %v77 = vadd.f32 %v73, 1e-05
    %v78 = vadd.f32 %v74, 1e-05
    %v79 = vadd.f32 %v75, 1e-05
    %v80 = vrsqrt.pop %v76
    %v81 = vmul.f32 %v80, %v76
    %v82 = vmul.f32 %v81, %v80
    %v83 = vmul.f32 0.5, %v82
    %v84 = vsub.f32 1.5, %v83
    %v85 = vmul.f32 %v80, %v84
    %vm86 = vweird.f32 %v76
    %vm87 = vweird.f32 %v80
    %vm88 = vmor %vm86, %vm87
    %v89 = vsel %vm88, %v80, %v85
    %v90 = vrsqrt.pop %v77
    %v91 = vmul.f32 %v90, %v77
    %v92 = vmul.f32 %v91, %v90
    %v93 = vmul.f32 0.5, %v92
    %v94 = vsub.f32 1.5, %v93
    %v95 = vmul.f32 %v90, %v94
    %vm96 = vweird.f32 %v77
    %vm97 = vweird.f32 %v90
    %vm98 = vmor %vm96, %vm97
    %v99 = vsel %vm98, %v90, %v95
    %v100 = vrsqrt.pop %v78
    %v101 = vmul.f32 %v100, %v78
    %v102 = vmul.f32 %v101, %v100
    %v103 = vmul.f32 0.5, %v102
    %v104 = vsub.f32 1.5, %v103
    %v105 = vmul.f32 %v100, %v104
    %vm106 = vweird.f32 %v78
    %vm107 = vweird.f32 %v100
    %vm108 = vmor %vm106, %vm107
    %v109 = vsel %vm108, %v100, %v105
    %v110 = vrsqrt.pop %v79
    %v111 = vmul.f32 %v110, %v79
    %v112 = vmul.f32 %v111, %v110
    %v113 = vmul.f32 0.5, %v112
    %v114 = vsub.f32 1.5, %v113
    %v115 = vmul.f32 %v110, %v114
    %vm116 = vweird.f32 %v79
    %vm117 = vweird.f32 %v110
    %vm118 = vmor %vm116, %vm117
    %v119 = vsel %vm118, %v110, %v115
    %v120 = vmul.f32 %v52, %v89
    %v121 = vmul.f32 %v53, %v99
    %v122 = vmul.f32 %v54, %v109
    %v123 = vmul.f32 %v55, %v119
    %v125 = vperm.slane %v26, 0
    %v127 = vmul.f32 %v120, %v125
    %v128 = vmul.f32 %v121, %v125
    %v129 = vmul.f32 %v122, %v125
    %v130 = vmul.f32 %v123, %v125
    %v132 = vperm.slane %v27, 0
    %v134 = vadd.f32 %v127, %v132
    %v135 = vadd.f32 %v128, %v132
    %v136 = vadd.f32 %v129, %v132
    %v137 = vadd.f32 %v130, %v132
    %v138 = vsel %vm28, %v134, 0.0
    %v139 = vsel %vm28, %v135, 0.0
    %v140 = vadd.f32 %v138, %v139
    %v141 = vrot.slane %v140, 4
    %v142 = vadd.f32 %v140, %v141
    %v143 = vrot.slane %v142, 2
    %v144 = vadd.f32 %v142, %v143
    %v145 = vrot.slane %v144, 1
    %v146 = vadd.f32 %v144, %v145
    %v147 = vsel %vm28, %v136, 0.0
    %v148 = vsel %vm28, %v137, 0.0
    %v149 = vadd.f32 %v147, %v148
    %v150 = vrot.slane %v149, 4
    %v151 = vadd.f32 %v149, %v150
    %v152 = vrot.slane %v151, 2
    %v153 = vadd.f32 %v151, %v152
    %v154 = vrot.slane %v153, 1
    %v155 = vadd.f32 %v153, %v154
    %v156 = vrcp.pop 16.0
    %v157 = vmul.f32 16.0, %v156
    %v158 = vsub.f32 1.0, %v157
    %v159 = vmul.f32 %v156, %v158
    %v160 = vadd.f32 %v156, %v159
    %vm161 = vweird.f32 %v156
    %v162 = vsel %vm161, %v156, %v160
    %v163 = vmul.f32 %v146, %v162
    %v164 = vmul.f32 %v155, %v162
    %v165 = vpack.c.bf16 %v163, %v163
    %v166 = vpack.c.bf16 %v164, %v164
    %v167 = vld [vmem:[%s3] sm:$0xf]
    %v168 = vld [vmem:[%s3 + $0x4] sm:$0xf]
    %v169 = vld [vmem:[%s3 + $0x8] sm:$0xf]
    %v170 = vld [vmem:[%s3 + $0xc] sm:$0xf]
    %v171 = vld [vmem:[%s4] sm:$0x1]
    %v173 = vperm.slane %v171, 0
    %v177 = vunpack.c.l.b16 %v165
    %v178 = vunpack.c.l.b16 %v166
    %vm179 = vcmask 1041409
    %v180 = vsel %vm179, %v178, %v177
    %v181 = vpack.c.b16 %v180, %v180
    %v186 = vunpack.c.l.b16 %v167
    %v187 = vunpack.c.l.b16 %v168
    %v188 = vunpack.c.l.b16 %v169
    %v189 = vunpack.c.l.b16 %v170
    %v190 = vpack.c.b16 %v187, %v186
    %v191 = vpack.c.b16 %v189, %v188
    %v195 = vsel %vm28, %v181, 0
    %197 = vmatpush.bf16.msra.mxu0 0
    %198 = vmatpush.bf16.msra.mxu0 0
    %199 = vmatpush.bf16.msra.mxu0 0
    %200 = vmatpush.bf16.msra.mxu0 0
    %201 = vmatpush.bf16.msra.mxu0 0
    %202 = vmatpush.bf16.msra.mxu0 0
    %203 = vmatpush.bf16.msra.mxu0 %v191
    %204 = vmatpush.bf16.msra.mxu0 %v190
    %205 = vmatmul.bf16.gmra.mxu0 %v195
    %v206 = vpop.f32.mrf.mxu0
    %v207 = vadd.f32 %v173, %v206
    %v208 = vpop.f32.mrf.mxu0
    %209 = vdwg.mxu0
    %210 = vst [vmem:[#allocation2] sm:$0x3] %v207
    // Predicated region
    $region22: #{mlp_mixer_forward.3} parent=1 // pred_check
      _
    $region23: #{mlp_mixer_forward.3} parent=1 // pred_check_branch
      %212 = sbr.rel (0) target = $region25
    $region24: #{mlp_mixer_forward.3} parent=1 // pred_region
      %214 = vsyncadd [#allocation3], 0
      %s216 = sshll.u32 [#allocation2], 4
      %s217 = int_to_ptr.vmem [resolvable:$true] %s216
      %s218 = sshll.u32 %s5, 4
      %s219 = int_to_ptr.hbm [resolvable:$true] %s218
      %221 = dma.vmem_to_hbm [thread:$0]  %s217, 32, %s219, [#allocation3]
    $region25: #{mlp_mixer_forward.3} parent=1 // pred_fallthru
      _
    // Predicated region
    $region26: #{mlp_mixer_forward.3} parent=1 // pred_check
      _
    $region27: #{mlp_mixer_forward.3} parent=1 // pred_check_branch
      %223 = sbr.rel (0) target = $region29
    $region28: #{mlp_mixer_forward.3} parent=1 // pred_region
      %225 = dma.done [#allocation3], 32
    $region29: #{mlp_mixer_forward.3} parent=1 // pred_fallthru
      _
    %226 = vsyncpa [#allocation3], 1

// kernel: mlp_mixer_forward.2
$region0: #{mlp_mixer_forward.2}
  #allocation0 [shape = 'u32[]', space=smem, size = 0x4, offset = 0x4, fixed_abs, tag = 'smem constant byte address 0x4 - core index']
  #allocation1 [shape = 'u32[72,128]{1,0:T(1,128)}', space=vmem, size = 0x9000, scoped, tag = 'internal scratch']
  %s0 = inlined_call_operand.vmem [shape: bf16[2,16,48], index: 0, kind: input, shape index: {}]
  %s1 = inlined_call_operand.vmem [shape: bf16[48,32], index: 1, kind: input, shape index: {}]
  %s2 = inlined_call_operand.vmem [shape: f32[1,32], index: 2, kind: input, shape index: {}]
  %s3 = inlined_call_operand.vmem [shape: f32[2,1,32], index: 3, kind: input, shape index: {}]
  %s4 = inlined_call_operand.vmem [shape: f32[2,1,32], index: 4, kind: input, shape index: {}]
  %s5 = inlined_call_operand.vmem [shape: bf16[2,16,16], index: 5, kind: input, shape index: {}]
  %s6 = inlined_call_operand.vmem [shape: f32[2,16,1], index: 6, kind: input, shape index: {}]
  %s7 = inlined_call_operand.vmem [shape: bf16[2,16,16], index: 7, kind: input, shape index: {}]
  %s8 = inlined_call_operand.vmem [shape: f32[2,16,1], index: 8, kind: input, shape index: {}]
  %s9 = inlined_call_operand.vmem [shape: f32[2,1,32], index: 9, kind: input, shape index: {}]
  %s10 = inlined_call_operand.vmem [shape: f32[2,1,32], index: 10, kind: input, shape index: {}]
  %s11 = inlined_call_operand.vmem [shape: bf16[2,32,128], index: 11, kind: input, shape index: {}]
  %s12 = inlined_call_operand.vmem [shape: f32[2,1,128], index: 12, kind: input, shape index: {}]
  %s13 = inlined_call_operand.vmem [shape: bf16[2,128,32], index: 13, kind: input, shape index: {}]
  %s14 = inlined_call_operand.vmem [shape: f32[2,1,32], index: 14, kind: input, shape index: {}]
  %s15 = inlined_call_operand.vmem [shape: f32[2,16,32], index: 15, kind: output, shape index: {}]
  %s16 = sld [smem:[#allocation0]]
  $region97: #{mlp_mixer_forward.2} parent=0
    _
  %s18 = ssub.s32 1, %s16
  %s19 = scalar_select 0, %s18, %s16
  loop: start=0, step=1, limit=6
  $region2: #{mlp_mixer_forward.2} parent=0 // loop_pre_header
    _
  $region3: #{mlp_mixer_forward.2} parent=0 // loop_header
    %s21 = sphi 0, %s25
    %p22 = scmp.ge.s32.totalorder %s21, 6
    %s28 = sphi 0, %s40
    %s29 = sphi 0, %s36
    %s30 = sphi 0, %s28
    %s31 = sphi 0, %s29
    %s32 = sphi 0, %s30
    %s33 = sphi 0, %s31
    %s43 = sphi 0, %s45
    %s46 = sphi 0, %s43
    %s47 = sphi 0, %s46
    %s63 = sphi 0, %s47
    %s67 = sphi 0, %s67
    %s69 = sphi 0, %s67
    %s70 = sphi 0, %s69
    %s84 = sphi 0, %s70
    %s88 = sphi 0, %s88
    %s90 = sphi 0, %s88
    %s91 = sphi 0, %s90
    %s105 = sphi 0, %s91
    %s111 = sphi 0, %s113
    %s114 = sphi 0, %s111
    %s115 = sphi 0, %s114
    %s131 = sphi 0, %s115
    %s137 = sphi 0, %s139
    %s140 = sphi 0, %s137
    %s141 = sphi 0, %s140
    %s157 = sphi 0, %s141
    %s163 = sphi 0, %s165
    %s166 = sphi 0, %s163
    %s167 = sphi 0, %s166
    %s183 = sphi 0, %s167
    %s189 = sphi 0, %s191
    %s192 = sphi 0, %s189
    %s193 = sphi 0, %s192
    %s209 = sphi 0, %s193
    %s215 = sphi 0, %s217
    %s218 = sphi 0, %s215
    %s219 = sphi 0, %s218
    %s235 = sphi 0, %s219
    %s241 = sphi 0, %s243
    %s244 = sphi 0, %s241
    %s245 = sphi 0, %s244
    %s261 = sphi 0, %s245
    %s267 = sphi 0, %s269
    %s270 = sphi 0, %s267
    %s271 = sphi 0, %s270
    %s287 = sphi 0, %s271
    %s293 = sphi 0, %s295
    %s296 = sphi 0, %s293
    %s297 = sphi 0, %s296
    %s313 = sphi 0, %s297
    %s319 = sphi 0, %s321
    %s322 = sphi 0, %s319
    %s323 = sphi 0, %s322
    %s339 = sphi 0, %s323
    %s345 = sphi 0, %s347
    %s348 = sphi 0, %s345
    %s349 = sphi 0, %s348
    %s365 = sphi 0, %s349
    %s371 = sphi 0, %s373
    %s374 = sphi 0, %s371
    %s375 = sphi 0, %s374
    %s391 = sphi 0, %s375
    %s397 = sphi 0, %s399
    %s400 = sphi 0, %s397
    %s401 = sphi 0, %s400
    %s417 = sphi 0, %s401
    %s423 = sphi 0, %s425
    %s426 = sphi 0, %s423
    %s427 = sphi 0, %s426
    %s443 = sphi 0, %s427
  $region4: #{mlp_mixer_forward.2} parent=0 // loop_header_branch
    %24 = sbr.rel (%p22) target = $region8
  $region5: #{mlp_mixer_forward.2} parent=0 // loop_body
    %s26 = ssub.s32 %s21, 1
    %s27 = ssub.s32 %s21, 2
    %s34 = sadd.s32 1, %s29
    %p35 = scmp.ge.s32.totalorder %s34, 2
    %s36 = scalar_select %p35, 0, %s34
    %s37 = sadd.s32 1, %s28
    %s38 = scalar_select %p35, %s37, %s28
    %p39 = scmp.ge.s32.totalorder %s38, 2
    %s40 = scalar_select %p39, 0, %s38
    %s41 = ssub.s32 %s28, %s40
    %p42 = scmp.eq.s32.totalorder %s41, 0
    %s44 = sadd.s32 %s43, 1
    %s45 = scalar_select %p42, %s43, %s44
    %p48 = pneg %p42
    %p49 = scmp.eq.s32.totalorder %s21, 3
    %p50 = por %p48, %p49
    %p51 = scmp.ne.s32.totalorder %s43, %s46
    %p52 = scmp.eq.s32.totalorder %s21, 0
    %p53 = por %p51, %p52
    %p54 = scmp.ne.s32.totalorder %s43, %s46
    %p55 = scmp.eq.s32.totalorder %s26, 3
    %p56 = por %p54, %p55
    %p57 = scmp.ne.s32.totalorder %s46, %s47
    %p58 = scmp.eq.s32.totalorder %s26, 0
    %p59 = por %p57, %p58
    %p60 = scmp.ne.s32.totalorder %s46, %s47
    %p61 = scmp.eq.s32.totalorder %s27, 3
    %p62 = por %p60, %p61
    %p64 = scmp.ne.s32.totalorder %s47, %s63
    %p65 = scmp.eq.s32.totalorder %s27, 0
    %p66 = por %p64, %p65
    %s68 = sadd.s32 %s67, 1
    %p71 = scmp.eq.s32.totalorder %s21, 3
    %p72 = scmp.ne.s32.totalorder %s67, %s69
    %p73 = scmp.eq.s32.totalorder %s21, 0
    %p74 = por %p72, %p73
    %p75 = scmp.ne.s32.totalorder %s67, %s69
    %p76 = scmp.eq.s32.totalorder %s26, 3
    %p77 = por %p75, %p76
    %p78 = scmp.ne.s32.totalorder %s69, %s70
    %p79 = scmp.eq.s32.totalorder %s26, 0
    %p80 = por %p78, %p79
    %p81 = scmp.ne.s32.totalorder %s69, %s70
    %p82 = scmp.eq.s32.totalorder %s27, 3
    %p83 = por %p81, %p82
    %p85 = scmp.ne.s32.totalorder %s70, %s84
    %p86 = scmp.eq.s32.totalorder %s27, 0
    %p87 = por %p85, %p86
    %s89 = sadd.s32 %s88, 1
    %p92 = scmp.eq.s32.totalorder %s21, 3
    %p93 = scmp.ne.s32.totalorder %s88, %s90
    %p94 = scmp.eq.s32.totalorder %s21, 0
    %p95 = por %p93, %p94
    %p96 = scmp.ne.s32.totalorder %s88, %s90
    %p97 = scmp.eq.s32.totalorder %s26, 3
    %p98 = por %p96, %p97
    %p99 = scmp.ne.s32.totalorder %s90, %s91
    %p100 = scmp.eq.s32.totalorder %s26, 0
    %p101 = por %p99, %p100
    %p102 = scmp.ne.s32.totalorder %s90, %s91
    %p103 = scmp.eq.s32.totalorder %s27, 3
    %p104 = por %p102, %p103
    %p106 = scmp.ne.s32.totalorder %s91, %s105
    %p107 = scmp.eq.s32.totalorder %s27, 0
    %p108 = por %p106, %p107
    %s109 = ssub.s32 %s29, %s36
    %p110 = scmp.eq.s32.totalorder %s109, 0
    %s112 = sadd.s32 %s111, 1
    %s113 = scalar_select %p110, %s111, %s112
    %p116 = pneg %p110
    %p117 = scmp.eq.s32.totalorder %s21, 3
    %p118 = por %p116, %p117
    %p119 = scmp.ne.s32.totalorder %s111, %s114
    %p120 = scmp.eq.s32.totalorder %s21, 0
    %p121 = por %p119, %p120
    %p122 = scmp.ne.s32.totalorder %s111, %s114
    %p123 = scmp.eq.s32.totalorder %s26, 3
    %p124 = por %p122, %p123
    %p125 = scmp.ne.s32.totalorder %s114, %s115
    %p126 = scmp.eq.s32.totalorder %s26, 0
    %p127 = por %p125, %p126
    %p128 = scmp.ne.s32.totalorder %s114, %s115
    %p129 = scmp.eq.s32.totalorder %s27, 3
    %p130 = por %p128, %p129
    %p132 = scmp.ne.s32.totalorder %s115, %s131
    %p133 = scmp.eq.s32.totalorder %s27, 0
    %p134 = por %p132, %p133
    %s135 = ssub.s32 %s29, %s36
    %p136 = scmp.eq.s32.totalorder %s135, 0
    %s138 = sadd.s32 %s137, 1
    %s139 = scalar_select %p136, %s137, %s138
    %p142 = pneg %p136
    %p143 = scmp.eq.s32.totalorder %s21, 3
    %p144 = por %p142, %p143
    %p145 = scmp.ne.s32.totalorder %s137, %s140
    %p146 = scmp.eq.s32.totalorder %s21, 0
    %p147 = por %p145, %p146
    %p148 = scmp.ne.s32.totalorder %s137, %s140
    %p149 = scmp.eq.s32.totalorder %s26, 3
    %p150 = por %p148, %p149
    %p151 = scmp.ne.s32.totalorder %s140, %s141
    %p152 = scmp.eq.s32.totalorder %s26, 0
    %p153 = por %p151, %p152
    %p154 = scmp.ne.s32.totalorder %s140, %s141
    %p155 = scmp.eq.s32.totalorder %s27, 3
    %p156 = por %p154, %p155
    %p158 = scmp.ne.s32.totalorder %s141, %s157
    %p159 = scmp.eq.s32.totalorder %s27, 0
    %p160 = por %p158, %p159
    %s161 = ssub.s32 %s29, %s36
    %p162 = scmp.eq.s32.totalorder %s161, 0
    %s164 = sadd.s32 %s163, 1
    %s165 = scalar_select %p162, %s163, %s164
    %p168 = pneg %p162
    %p169 = scmp.eq.s32.totalorder %s21, 3
    %p170 = por %p168, %p169
    %p171 = scmp.ne.s32.totalorder %s163, %s166
    %p172 = scmp.eq.s32.totalorder %s21, 0
    %p173 = por %p171, %p172
    %p174 = scmp.ne.s32.totalorder %s163, %s166
    %p175 = scmp.eq.s32.totalorder %s26, 3
    %p176 = por %p174, %p175
    %p177 = scmp.ne.s32.totalorder %s166, %s167
    %p178 = scmp.eq.s32.totalorder %s26, 0
    %p179 = por %p177, %p178
    %p180 = scmp.ne.s32.totalorder %s166, %s167
    %p181 = scmp.eq.s32.totalorder %s27, 3
    %p182 = por %p180, %p181
    %p184 = scmp.ne.s32.totalorder %s167, %s183
    %p185 = scmp.eq.s32.totalorder %s27, 0
    %p186 = por %p184, %p185
    %s187 = ssub.s32 %s29, %s36
    %p188 = scmp.eq.s32.totalorder %s187, 0
    %s190 = sadd.s32 %s189, 1
    %s191 = scalar_select %p188, %s189, %s190
    %p194 = pneg %p188
    %p195 = scmp.eq.s32.totalorder %s21, 3
    %p196 = por %p194, %p195
    %p197 = scmp.ne.s32.totalorder %s189, %s192
    %p198 = scmp.eq.s32.totalorder %s21, 0
    %p199 = por %p197, %p198
    %p200 = scmp.ne.s32.totalorder %s189, %s192
    %p201 = scmp.eq.s32.totalorder %s26, 3
    %p202 = por %p200, %p201
    %p203 = scmp.ne.s32.totalorder %s192, %s193
    %p204 = scmp.eq.s32.totalorder %s26, 0
    %p205 = por %p203, %p204
    %p206 = scmp.ne.s32.totalorder %s192, %s193
    %p207 = scmp.eq.s32.totalorder %s27, 3
    %p208 = por %p206, %p207
    %p210 = scmp.ne.s32.totalorder %s193, %s209
    %p211 = scmp.eq.s32.totalorder %s27, 0
    %p212 = por %p210, %p211
    %s213 = ssub.s32 %s29, %s36
    %p214 = scmp.eq.s32.totalorder %s213, 0
    %s216 = sadd.s32 %s215, 1
    %s217 = scalar_select %p214, %s215, %s216
    %p220 = pneg %p214
    %p221 = scmp.eq.s32.totalorder %s21, 3
    %p222 = por %p220, %p221
    %p223 = scmp.ne.s32.totalorder %s215, %s218
    %p224 = scmp.eq.s32.totalorder %s21, 0
    %p225 = por %p223, %p224
    %p226 = scmp.ne.s32.totalorder %s215, %s218
    %p227 = scmp.eq.s32.totalorder %s26, 3
    %p228 = por %p226, %p227
    %p229 = scmp.ne.s32.totalorder %s218, %s219
    %p230 = scmp.eq.s32.totalorder %s26, 0
    %p231 = por %p229, %p230
    %p232 = scmp.ne.s32.totalorder %s218, %s219
    %p233 = scmp.eq.s32.totalorder %s27, 3
    %p234 = por %p232, %p233
    %p236 = scmp.ne.s32.totalorder %s219, %s235
    %p237 = scmp.eq.s32.totalorder %s27, 0
    %p238 = por %p236, %p237
    %s239 = ssub.s32 %s29, %s36
    %p240 = scmp.eq.s32.totalorder %s239, 0
    %s242 = sadd.s32 %s241, 1
    %s243 = scalar_select %p240, %s241, %s242
    %p246 = pneg %p240
    %p247 = scmp.eq.s32.totalorder %s21, 3
    %p248 = por %p246, %p247
    %p249 = scmp.ne.s32.totalorder %s241, %s244
    %p250 = scmp.eq.s32.totalorder %s21, 0
    %p251 = por %p249, %p250
    %p252 = scmp.ne.s32.totalorder %s241, %s244
    %p253 = scmp.eq.s32.totalorder %s26, 3
    %p254 = por %p252, %p253
    %p255 = scmp.ne.s32.totalorder %s244, %s245
    %p256 = scmp.eq.s32.totalorder %s26, 0
    %p257 = por %p255, %p256
    %p258 = scmp.ne.s32.totalorder %s244, %s245
    %p259 = scmp.eq.s32.totalorder %s27, 3
    %p260 = por %p258, %p259
    %p262 = scmp.ne.s32.totalorder %s245, %s261
    %p263 = scmp.eq.s32.totalorder %s27, 0
    %p264 = por %p262, %p263
    %s265 = ssub.s32 %s29, %s36
    %p266 = scmp.eq.s32.totalorder %s265, 0
    %s268 = sadd.s32 %s267, 1
    %s269 = scalar_select %p266, %s267, %s268
    %p272 = pneg %p266
    %p273 = scmp.eq.s32.totalorder %s21, 3
    %p274 = por %p272, %p273
    %p275 = scmp.ne.s32.totalorder %s267, %s270
    %p276 = scmp.eq.s32.totalorder %s21, 0
    %p277 = por %p275, %p276
    %p278 = scmp.ne.s32.totalorder %s267, %s270
    %p279 = scmp.eq.s32.totalorder %s26, 3
    %p280 = por %p278, %p279
    %p281 = scmp.ne.s32.totalorder %s270, %s271
    %p282 = scmp.eq.s32.totalorder %s26, 0
    %p283 = por %p281, %p282
    %p284 = scmp.ne.s32.totalorder %s270, %s271
    %p285 = scmp.eq.s32.totalorder %s27, 3
    %p286 = por %p284, %p285
    %p288 = scmp.ne.s32.totalorder %s271, %s287
    %p289 = scmp.eq.s32.totalorder %s27, 0
    %p290 = por %p288, %p289
    %s291 = ssub.s32 %s29, %s36
    %p292 = scmp.eq.s32.totalorder %s291, 0
    %s294 = sadd.s32 %s293, 1
    %s295 = scalar_select %p292, %s293, %s294
    %p298 = pneg %p292
    %p299 = scmp.eq.s32.totalorder %s21, 3
    %p300 = por %p298, %p299
    %p301 = scmp.ne.s32.totalorder %s293, %s296
    %p302 = scmp.eq.s32.totalorder %s21, 0
    %p303 = por %p301, %p302
    %p304 = scmp.ne.s32.totalorder %s293, %s296
    %p305 = scmp.eq.s32.totalorder %s26, 3
    %p306 = por %p304, %p305
    %p307 = scmp.ne.s32.totalorder %s296, %s297
    %p308 = scmp.eq.s32.totalorder %s26, 0
    %p309 = por %p307, %p308
    %p310 = scmp.ne.s32.totalorder %s296, %s297
    %p311 = scmp.eq.s32.totalorder %s27, 3
    %p312 = por %p310, %p311
    %p314 = scmp.ne.s32.totalorder %s297, %s313
    %p315 = scmp.eq.s32.totalorder %s27, 0
    %p316 = por %p314, %p315
    %s317 = ssub.s32 %s29, %s36
    %p318 = scmp.eq.s32.totalorder %s317, 0
    %s320 = sadd.s32 %s319, 1
    %s321 = scalar_select %p318, %s319, %s320
    %p324 = pneg %p318
    %p325 = scmp.eq.s32.totalorder %s21, 3
    %p326 = por %p324, %p325
    %p327 = scmp.ne.s32.totalorder %s319, %s322
    %p328 = scmp.eq.s32.totalorder %s21, 0
    %p329 = por %p327, %p328
    %p330 = scmp.ne.s32.totalorder %s319, %s322
    %p331 = scmp.eq.s32.totalorder %s26, 3
    %p332 = por %p330, %p331
    %p333 = scmp.ne.s32.totalorder %s322, %s323
    %p334 = scmp.eq.s32.totalorder %s26, 0
    %p335 = por %p333, %p334
    %p336 = scmp.ne.s32.totalorder %s322, %s323
    %p337 = scmp.eq.s32.totalorder %s27, 3
    %p338 = por %p336, %p337
    %p340 = scmp.ne.s32.totalorder %s323, %s339
    %p341 = scmp.eq.s32.totalorder %s27, 0
    %p342 = por %p340, %p341
    %s343 = ssub.s32 %s29, %s36
    %p344 = scmp.eq.s32.totalorder %s343, 0
    %s346 = sadd.s32 %s345, 1
    %s347 = scalar_select %p344, %s345, %s346
    %p350 = pneg %p344
    %p351 = scmp.eq.s32.totalorder %s21, 3
    %p352 = por %p350, %p351
    %p353 = scmp.ne.s32.totalorder %s345, %s348
    %p354 = scmp.eq.s32.totalorder %s21, 0
    %p355 = por %p353, %p354
    %p356 = scmp.ne.s32.totalorder %s345, %s348
    %p357 = scmp.eq.s32.totalorder %s26, 3
    %p358 = por %p356, %p357
    %p359 = scmp.ne.s32.totalorder %s348, %s349
    %p360 = scmp.eq.s32.totalorder %s26, 0
    %p361 = por %p359, %p360
    %p362 = scmp.ne.s32.totalorder %s348, %s349
    %p363 = scmp.eq.s32.totalorder %s27, 3
    %p364 = por %p362, %p363
    %p366 = scmp.ne.s32.totalorder %s349, %s365
    %p367 = scmp.eq.s32.totalorder %s27, 0
    %p368 = por %p366, %p367
    %s369 = ssub.s32 %s29, %s36
    %p370 = scmp.eq.s32.totalorder %s369, 0
    %s372 = sadd.s32 %s371, 1
    %s373 = scalar_select %p370, %s371, %s372
    %p376 = pneg %p370
    %p377 = scmp.eq.s32.totalorder %s21, 3
    %p378 = por %p376, %p377
    %p379 = scmp.ne.s32.totalorder %s371, %s374
    %p380 = scmp.eq.s32.totalorder %s21, 0
    %p381 = por %p379, %p380
    %p382 = scmp.ne.s32.totalorder %s371, %s374
    %p383 = scmp.eq.s32.totalorder %s26, 3
    %p384 = por %p382, %p383
    %p385 = scmp.ne.s32.totalorder %s374, %s375
    %p386 = scmp.eq.s32.totalorder %s26, 0
    %p387 = por %p385, %p386
    %p388 = scmp.ne.s32.totalorder %s374, %s375
    %p389 = scmp.eq.s32.totalorder %s27, 3
    %p390 = por %p388, %p389
    %p392 = scmp.ne.s32.totalorder %s375, %s391
    %p393 = scmp.eq.s32.totalorder %s27, 0
    %p394 = por %p392, %p393
    %s395 = ssub.s32 %s29, %s36
    %p396 = scmp.eq.s32.totalorder %s395, 0
    %s398 = sadd.s32 %s397, 1
    %s399 = scalar_select %p396, %s397, %s398
    %p402 = pneg %p396
    %p403 = scmp.eq.s32.totalorder %s21, 3
    %p404 = por %p402, %p403
    %p405 = scmp.ne.s32.totalorder %s397, %s400
    %p406 = scmp.eq.s32.totalorder %s21, 0
    %p407 = por %p405, %p406
    %p408 = scmp.ne.s32.totalorder %s397, %s400
    %p409 = scmp.eq.s32.totalorder %s26, 3
    %p410 = por %p408, %p409
    %p411 = scmp.ne.s32.totalorder %s400, %s401
    %p412 = scmp.eq.s32.totalorder %s26, 0
    %p413 = por %p411, %p412
    %p414 = scmp.ne.s32.totalorder %s400, %s401
    %p415 = scmp.eq.s32.totalorder %s27, 3
    %p416 = por %p414, %p415
    %p418 = scmp.ne.s32.totalorder %s401, %s417
    %p419 = scmp.eq.s32.totalorder %s27, 0
    %p420 = por %p418, %p419
    %s421 = ssub.s32 %s28, %s40
    %p422 = scmp.eq.s32.totalorder %s421, 0
    %s424 = sadd.s32 %s423, 1
    %s425 = scalar_select %p422, %s423, %s424
    %p428 = pneg %p422
    %p429 = scmp.eq.s32.totalorder %s21, 3
    %p430 = por %p428, %p429
    %p431 = scmp.ne.s32.totalorder %s423, %s426
    %p432 = scmp.eq.s32.totalorder %s21, 0
    %p433 = por %p431, %p432
    %p434 = scmp.ne.s32.totalorder %s423, %s426
    %p435 = scmp.eq.s32.totalorder %s26, 3
    %p436 = por %p434, %p435
    %p437 = scmp.ne.s32.totalorder %s426, %s427
    %p438 = scmp.eq.s32.totalorder %s26, 0
    %p439 = por %p437, %p438
    %p440 = scmp.ne.s32.totalorder %s426, %s427
    %p441 = scmp.eq.s32.totalorder %s27, 3
    %p442 = por %p440, %p441
    %p444 = scmp.ne.s32.totalorder %s427, %s443
    %p445 = scmp.eq.s32.totalorder %s27, 0
    %p446 = por %p444, %p445
    %p447 = scmp.le.s32.totalorder 1, %s21
    %p448 = scmp.lt.s32.totalorder %s21, 5
    %p449 = pnand %p447, %p448
    %p450 = pneg %p449
    // Predicated region
    $region9: #{mlp_mixer_forward.2} parent=5 // pred_check
      _
    $region10: #{mlp_mixer_forward.2} parent=5 // pred_check_branch
      %452 = sbr.rel (%p449) target = $region12
    $region11: #{mlp_mixer_forward.2} parent=5 // pred_region
      %s453 = ssub.s32 %s21, 1
      // Predicated region
      $region13: #{mlp_mixer_forward.2} parent=11 // pred_check
        %p454 = pneg %p80
      $region14: #{mlp_mixer_forward.2} parent=11 // pred_check_branch
        %456 = sbr.rel (%p454) target = $region16
      $region15: #{mlp_mixer_forward.2} parent=11 // pred_region
        _
      $region16: #{mlp_mixer_forward.2} parent=11 // pred_fallthru
        _
      // Predicated region
      $region17: #{mlp_mixer_forward.2} parent=11 // pred_check
        %p457 = pneg %p101
      $region18: #{mlp_mixer_forward.2} parent=11 // pred_check_branch
        %459 = sbr.rel (%p457) target = $region20
      $region19: #{mlp_mixer_forward.2} parent=11 // pred_region
        _
      $region20: #{mlp_mixer_forward.2} parent=11 // pred_fallthru
        _
    $region12: #{mlp_mixer_forward.2} parent=5 // pred_fallthru
      _
    %p460 = scmp.lt.s32.totalorder %s21, 4
    // Predicated region
    $region21: #{mlp_mixer_forward.2} parent=5 // pred_check
      %p461 = pneg %p460
    $region22: #{mlp_mixer_forward.2} parent=5 // pred_check_branch
      %463 = sbr.rel (%p461) target = $region24
    $region23: #{mlp_mixer_forward.2} parent=5 // pred_region
      // Predicated region
      $region25: #{mlp_mixer_forward.2} parent=23 // pred_check
        %p464 = pneg %p53
      $region26: #{mlp_mixer_forward.2} parent=23 // pred_check_branch
        %466 = sbr.rel (%p464) target = $region28
      $region27: #{mlp_mixer_forward.2} parent=23 // pred_region
        %p467 = scmp.lt.s32.totalorder %s28, 1
        %s468 = scalar_select %p467, %s28, 1
        %s469 = smul.addr %s468, 2
        %s470 = smul.addr %s469, 4
        %s471 = scalar_lea.vmem %s0, %s470
      $region28: #{mlp_mixer_forward.2} parent=23 // pred_fallthru
        _
      // Predicated region
      $region29: #{mlp_mixer_forward.2} parent=23 // pred_check
        %p472 = pneg %p121
      $region30: #{mlp_mixer_forward.2} parent=23 // pred_check_branch
        %474 = sbr.rel (%p472) target = $region32
      $region31: #{mlp_mixer_forward.2} parent=23 // pred_region
        %p475 = scmp.lt.s32.totalorder %s29, 1
        %s476 = scalar_select %p475, %s29, 1
        %s477 = scalar_lea.vmem %s3, %s476
      $region32: #{mlp_mixer_forward.2} parent=23 // pred_fallthru
        _
      // Predicated region
      $region33: #{mlp_mixer_forward.2} parent=23 // pred_check
        %p478 = pneg %p147
      $region34: #{mlp_mixer_forward.2} parent=23 // pred_check_branch
        %480 = sbr.rel (%p478) target = $region36
      $region35: #{mlp_mixer_forward.2} parent=23 // pred_region
        %p481 = scmp.lt.s32.totalorder %s29, 1
        %s482 = scalar_select %p481, %s29, 1
        %s483 = scalar_lea.vmem %s4, %s482
      $region36: #{mlp_mixer_forward.2} parent=23 // pred_fallthru
        _
      // Predicated region
      $region37: #{mlp_mixer_forward.2} parent=23 // pred_check
        %p484 = pneg %p173
      $region38: #{mlp_mixer_forward.2} parent=23 // pred_check_branch
        %486 = sbr.rel (%p484) target = $region40
      $region39: #{mlp_mixer_forward.2} parent=23 // pred_region
        %p487 = scmp.lt.s32.totalorder %s29, 1
        %s488 = scalar_select %p487, %s29, 1
        %s489 = smul.addr %s488, 2
        %s490 = smul.addr %s489, 4
        %s491 = scalar_lea.vmem %s5, %s490
      $region40: #{mlp_mixer_forward.2} parent=23 // pred_fallthru
        _
      // Predicated region
      $region41: #{mlp_mixer_forward.2} parent=23 // pred_check
        %p492 = pneg %p199
      $region42: #{mlp_mixer_forward.2} parent=23 // pred_check_branch
        %494 = sbr.rel (%p492) target = $region44
      $region43: #{mlp_mixer_forward.2} parent=23 // pred_region
        %p495 = scmp.lt.s32.totalorder %s29, 1
        %s496 = scalar_select %p495, %s29, 1
        %s497 = smul.addr %s496, 2
        %s498 = smul.addr %s497, 8
        %s499 = scalar_lea.vmem %s6, %s498
      $region44: #{mlp_mixer_forward.2} parent=23 // pred_fallthru
        _
      // Predicated region
      $region45: #{mlp_mixer_forward.2} parent=23 // pred_check
        %p500 = pneg %p225
      $region46: #{mlp_mixer_forward.2} parent=23 // pred_check_branch
        %502 = sbr.rel (%p500) target = $region48
      $region47: #{mlp_mixer_forward.2} parent=23 // pred_region
        %p503 = scmp.lt.s32.totalorder %s29, 1
        %s504 = scalar_select %p503, %s29, 1
        %s505 = smul.addr %s504, 2
        %s506 = smul.addr %s505, 4
        %s507 = scalar_lea.vmem %s7, %s506
      $region48: #{mlp_mixer_forward.2} parent=23 // pred_fallthru
        _
      // Predicated region
      $region49: #{mlp_mixer_forward.2} parent=23 // pred_check
        %p508 = pneg %p251
      $region50: #{mlp_mixer_forward.2} parent=23 // pred_check_branch
        %510 = sbr.rel (%p508) target = $region52
      $region51: #{mlp_mixer_forward.2} parent=23 // pred_region
        %p511 = scmp.lt.s32.totalorder %s29, 1
        %s512 = scalar_select %p511, %s29, 1
        %s513 = smul.addr %s512, 2
        %s514 = smul.addr %s513, 8
        %s515 = scalar_lea.vmem %s8, %s514
      $region52: #{mlp_mixer_forward.2} parent=23 // pred_fallthru
        _
      // Predicated region
      $region53: #{mlp_mixer_forward.2} parent=23 // pred_check
        %p516 = pneg %p277
      $region54: #{mlp_mixer_forward.2} parent=23 // pred_check_branch
        %518 = sbr.rel (%p516) target = $region56
      $region55: #{mlp_mixer_forward.2} parent=23 // pred_region
        %p519 = scmp.lt.s32.totalorder %s29, 1
        %s520 = scalar_select %p519, %s29, 1
        %s521 = scalar_lea.vmem %s9, %s520
      $region56: #{mlp_mixer_forward.2} parent=23 // pred_fallthru
        _
      // Predicated region
      $region57: #{mlp_mixer_forward.2} parent=23 // pred_check
        %p522 = pneg %p303
      $region58: #{mlp_mixer_forward.2} parent=23 // pred_check_branch
        %524 = sbr.rel (%p522) target = $region60
      $region59: #{mlp_mixer_forward.2} parent=23 // pred_region
        %p525 = scmp.lt.s32.totalorder %s29, 1
        %s526 = scalar_select %p525, %s29, 1
        %s527 = scalar_lea.vmem %s10, %s526
      $region60: #{mlp_mixer_forward.2} parent=23 // pred_fallthru
        _
      // Predicated region
      $region61: #{mlp_mixer_forward.2} parent=23 // pred_check
        %p528 = pneg %p329
      $region62: #{mlp_mixer_forward.2} parent=23 // pred_check_branch
        %530 = sbr.rel (%p528) target = $region64
      $region63: #{mlp_mixer_forward.2} parent=23 // pred_region
        %p531 = scmp.lt.s32.totalorder %s29, 1
        %s532 = scalar_select %p531, %s29, 1
        %s533 = smul.addr %s532, 4
        %s534 = smul.addr %s533, 4
        %s535 = scalar_lea.vmem %s11, %s534
      $region64: #{mlp_mixer_forward.2} parent=23 // pred_fallthru
        _
      // Predicated region
      $region65: #{mlp_mixer_forward.2} parent=23 // pred_check
        %p536 = pneg %p355
      $region66: #{mlp_mixer_forward.2} parent=23 // pred_check_branch
        %538 = sbr.rel (%p536) target = $region68
      $region67: #{mlp_mixer_forward.2} parent=23 // pred_region
        %p539 = scmp.lt.s32.totalorder %s29, 1
        %s540 = scalar_select %p539, %s29, 1
        %s541 = scalar_lea.vmem %s12, %s540
      $region68: #{mlp_mixer_forward.2} parent=23 // pred_fallthru
        _
      // Predicated region
      $region69: #{mlp_mixer_forward.2} parent=23 // pred_check
        %p542 = pneg %p381
      $region70: #{mlp_mixer_forward.2} parent=23 // pred_check_branch
        %544 = sbr.rel (%p542) target = $region72
      $region71: #{mlp_mixer_forward.2} parent=23 // pred_region
        %p545 = scmp.lt.s32.totalorder %s29, 1
        %s546 = scalar_select %p545, %s29, 1
        %s547 = smul.addr %s546, 16
        %s548 = smul.addr %s547, 4
        %s549 = scalar_lea.vmem %s13, %s548
      $region72: #{mlp_mixer_forward.2} parent=23 // pred_fallthru
        _
      // Predicated region
      $region73: #{mlp_mixer_forward.2} parent=23 // pred_check
        %p550 = pneg %p407
      $region74: #{mlp_mixer_forward.2} parent=23 // pred_check_branch
        %552 = sbr.rel (%p550) target = $region76
      $region75: #{mlp_mixer_forward.2} parent=23 // pred_region
        %p553 = scmp.lt.s32.totalorder %s29, 1
        %s554 = scalar_select %p553, %s29, 1
        %s555 = scalar_lea.vmem %s14, %s554
      $region76: #{mlp_mixer_forward.2} parent=23 // pred_fallthru
        _
    $region24: #{mlp_mixer_forward.2} parent=5 // pred_fallthru
      _
    %p556 = scmp.le.s32.totalorder 1, %s21
    %p557 = scmp.lt.s32.totalorder %s21, 5
    %p558 = pnand %p556, %p557
    %p559 = pneg %p558
    // Predicated region
    $region77: #{mlp_mixer_forward.2} parent=5 // pred_check
      _
    $region78: #{mlp_mixer_forward.2} parent=5 // pred_check_branch
      %561 = sbr.rel (%p558) target = $region80
    $region79: #{mlp_mixer_forward.2} parent=5 // pred_region
      %s562 = ssub.s32 %s21, 1
      %p563 = scmp.lt.s32.totalorder %s30, 1
      %s564 = scalar_select %p563, %s30, 1
      %s565 = smul.addr %s564, 2
      %s566 = smul.addr %s565, 4
      %s567 = scalar_lea.vmem %s0, %s566
      %p568 = pneg %p59
      %p569 = pneg %p56
      %p570 = pneg %p80
      %p571 = pneg %p77
      %p572 = pneg %p101
      %p573 = pneg %p98
      %p574 = scmp.lt.s32.totalorder %s31, 1
      %s575 = scalar_select %p574, %s31, 1
      %s576 = scalar_lea.vmem %s3, %s575
      %p577 = pneg %p127
      %p578 = pneg %p124
      %p579 = scmp.lt.s32.totalorder %s31, 1
      %s580 = scalar_select %p579, %s31, 1
      %s581 = scalar_lea.vmem %s4, %s580
      %p582 = pneg %p153
      %p583 = pneg %p150
      %p584 = scmp.lt.s32.totalorder %s31, 1
      %s585 = scalar_select %p584, %s31, 1
      %s586 = smul.addr %s585, 2
      %s587 = smul.addr %s586, 4
      %s588 = scalar_lea.vmem %s5, %s587
      %p589 = pneg %p179
      %p590 = pneg %p176
      %p591 = scmp.lt.s32.totalorder %s31, 1
      %s592 = scalar_select %p591, %s31, 1
      %s593 = smul.addr %s592, 2
      %s594 = smul.addr %s593, 8
      %s595 = scalar_lea.vmem %s6, %s594
      %p596 = pneg %p205
      %p597 = pneg %p202
      %p598 = scmp.lt.s32.totalorder %s31, 1
      %s599 = scalar_select %p598, %s31, 1
      %s600 = smul.addr %s599, 2
      %s601 = smul.addr %s600, 4
      %s602 = scalar_lea.vmem %s7, %s601
      %p603 = pneg %p231
      %p604 = pneg %p228
      %p605 = scmp.lt.s32.totalorder %s31, 1
      %s606 = scalar_select %p605, %s31, 1
      %s607 = smul.addr %s606, 2
      %s608 = smul.addr %s607, 8
      %s609 = scalar_lea.vmem %s8, %s608
      %p610 = pneg %p257
      %p611 = pneg %p254
      %p612 = scmp.lt.s32.totalorder %s31, 1
      %s613 = scalar_select %p612, %s31, 1
      %s614 = scalar_lea.vmem %s9, %s613
      %p615 = pneg %p283
      %p616 = pneg %p280
      %p617 = scmp.lt.s32.totalorder %s31, 1
      %s618 = scalar_select %p617, %s31, 1
      %s619 = scalar_lea.vmem %s10, %s618
      %p620 = pneg %p309
      %p621 = pneg %p306
      %p622 = scmp.lt.s32.totalorder %s31, 1
      %s623 = scalar_select %p622, %s31, 1
      %s624 = smul.addr %s623, 4
      %s625 = smul.addr %s624, 4
      %s626 = scalar_lea.vmem %s11, %s625
      %p627 = pneg %p335
      %p628 = pneg %p332
      %p629 = scmp.lt.s32.totalorder %s31, 1
      %s630 = scalar_select %p629, %s31, 1
      %s631 = scalar_lea.vmem %s12, %s630
      %p632 = pneg %p361
      %p633 = pneg %p358
      %p634 = scmp.lt.s32.totalorder %s31, 1
      %s635 = scalar_select %p634, %s31, 1
      %s636 = smul.addr %s635, 16
      %s637 = smul.addr %s636, 4
      %s638 = scalar_lea.vmem %s13, %s637
      %p639 = pneg %p387
      %p640 = pneg %p384
      %p641 = scmp.lt.s32.totalorder %s31, 1
      %s642 = scalar_select %p641, %s31, 1
      %s643 = scalar_lea.vmem %s14, %s642
      %p644 = pneg %p413
      %p645 = pneg %p410
      %p646 = pneg %p439
      %p647 = pneg %p436
      %p648 = scmp.lt.s32.totalorder %s30, 1
      %s649 = scalar_select %p648, %s30, 1
      %s650 = smul.addr %s649, 2
      %s651 = smul.addr %s650, 8
      %s652 = scalar_lea.vmem %s15, %s651
      %p653 = scmp.lt.s32.totalorder %s30, 1
      %s654 = scalar_select %p653, %s30, 1
      %s655 = smul.addr %s654, 2
      %s656 = smul.addr %s655, 4
      %s657 = scalar_lea.vmem %s0, %s656
      %p658 = scmp.lt.s32.totalorder %s31, 1
      %s659 = scalar_select %p658, %s31, 1
      %s660 = scalar_lea.vmem %s3, %s659
      %p661 = scmp.lt.s32.totalorder %s31, 1
      %s662 = scalar_select %p661, %s31, 1
      %s663 = scalar_lea.vmem %s4, %s662
      %p664 = scmp.lt.s32.totalorder %s31, 1
      %s665 = scalar_select %p664, %s31, 1
      %s666 = smul.addr %s665, 2
      %s667 = smul.addr %s666, 4
      %s668 = scalar_lea.vmem %s5, %s667
      %p669 = scmp.lt.s32.totalorder %s31, 1
      %s670 = scalar_select %p669, %s31, 1
      %s671 = smul.addr %s670, 2
      %s672 = smul.addr %s671, 8
      %s673 = scalar_lea.vmem %s6, %s672
      %p674 = scmp.lt.s32.totalorder %s31, 1
      %s675 = scalar_select %p674, %s31, 1
      %s676 = smul.addr %s675, 2
      %s677 = smul.addr %s676, 4
      %s678 = scalar_lea.vmem %s7, %s677
      %p679 = scmp.lt.s32.totalorder %s31, 1
      %s680 = scalar_select %p679, %s31, 1
      %s681 = smul.addr %s680, 2
      %s682 = smul.addr %s681, 8
      %s683 = scalar_lea.vmem %s8, %s682
      %p684 = scmp.lt.s32.totalorder %s31, 1
      %s685 = scalar_select %p684, %s31, 1
      %s686 = scalar_lea.vmem %s9, %s685
      %p687 = scmp.lt.s32.totalorder %s31, 1
      %s688 = scalar_select %p687, %s31, 1
      %s689 = scalar_lea.vmem %s10, %s688
      %p690 = scmp.lt.s32.totalorder %s31, 1
      %s691 = scalar_select %p690, %s31, 1
      %s692 = smul.addr %s691, 4
      %s693 = smul.addr %s692, 4
      %s694 = scalar_lea.vmem %s11, %s693
      %p695 = scmp.lt.s32.totalorder %s31, 1
      %s696 = scalar_select %p695, %s31, 1
      %s697 = scalar_lea.vmem %s12, %s696
      %p698 = scmp.lt.s32.totalorder %s31, 1
      %s699 = scalar_select %p698, %s31, 1
      %s700 = smul.addr %s699, 16
      %s701 = smul.addr %s700, 4
      %s702 = scalar_lea.vmem %s13, %s701
      %p703 = scmp.lt.s32.totalorder %s31, 1
      %s704 = scalar_select %p703, %s31, 1
      %s705 = scalar_lea.vmem %s14, %s704
      %p706 = scmp.lt.s32.totalorder %s30, 1
      %s707 = scalar_select %p706, %s30, 1
      %s708 = smul.addr %s707, 2
      %s709 = smul.addr %s708, 8
      %s710 = scalar_lea.vmem %s15, %s709
      %p712 = scmp.eq.s32.totalorder %s31, 0
      // Predicated region
      $region81: #{mlp_mixer_forward.2} parent=79 // pred_check
        %p713 = pneg %p712
      $region82: #{mlp_mixer_forward.2} parent=79 // pred_check_branch
        %715 = sbr.rel (%p713) target = $region84
      $region83: #{mlp_mixer_forward.2} parent=79 // pred_region
        %v716 = vld [vmem:[%s1] sm:$0xf]
        %v717 = vld [vmem:[%s1 + $0x4] sm:$0xf]
        %v718 = vld [vmem:[%s1 + $0x8] sm:$0xf]
        %v719 = vld [vmem:[%s1 + $0xc] sm:$0xf]
        %v720 = vld [vmem:[%s1 + $0x10] sm:$0xf]
        %v721 = vld [vmem:[%s1 + $0x14] sm:$0xf]
        %v722 = vld [vmem:[%s2] sm:$0x1]
        %v723 = vld [vmem:[%s657] sm:$0xf]
        %v724 = vld [vmem:[%s657 + $0x4] sm:$0xf]
        %v726 = vperm.slane %v722, 0
        %v730 = vunpack.c.l.b16 %v723
        %v731 = vunpack.c.l.b16 %v724
        %v732 = vpack.c.b16 %v731, %v730
        %v739 = vunpack.c.l.b16 %v716
        %v740 = vunpack.c.l.b16 %v717
        %v741 = vunpack.c.l.b16 %v718
        %v742 = vunpack.c.l.b16 %v719
        %v743 = vunpack.c.l.b16 %v720
        %v744 = vunpack.c.l.b16 %v721
        %v745 = vpack.c.b16 %v740, %v739
        %v746 = vpack.c.b16 %v742, %v741
        %v747 = vpack.c.b16 %v744, %v743
        %vm751 = vcmask 392192
        %v753 = vsel %vm751, %v732, 0
        %755 = vmatpush.bf16.msra.mxu0 0
        %756 = vmatpush.bf16.msra.mxu0 0
        %757 = vmatpush.bf16.msra.mxu0 0
        %758 = vmatpush.bf16.msra.mxu0 0
        %759 = vmatpush.bf16.msra.mxu0 0
        %760 = vmatpush.bf16.msra.mxu0 %v747
        %761 = vmatpush.bf16.msra.mxu0 %v746
        %762 = vmatpush.bf16.msra.mxu0 %v745
        %763 = vmatmul.bf16.gmra.mxu0 %v753
        %v764 = vpop.f32.mrf.mxu0
        %v765 = vadd.f32 %v726, %v764
        %v766 = vpop.f32.mrf.mxu0
        %v767 = vadd.f32 %v726, %v766
        %768 = vdwg.mxu0
        %vm769 = vcmask 261120
        %770 = vst.msk [vmem:[%s710] sm:$0xff] %vm769, %v765
        %771 = vst.msk [vmem:[%s710 + $0x8] sm:$0xff] %vm769, %v767
      $region84: #{mlp_mixer_forward.2} parent=79 // pred_fallthru
        _
      %v772 = vld [vmem:[%s660] sm:$0x1]
      %v773 = vld [vmem:[%s663] sm:$0x1]
      %v774 = vld [vmem:[%s668] sm:$0xf]
      %v775 = vld [vmem:[%s668 + $0x4] sm:$0xf]
      %v776 = vld [vmem:[%s673] sm:$0xff]
      %v777 = vld [vmem:[%s673 + $0x8] sm:$0xff]
      %v778 = vld [vmem:[%s678] sm:$0xf]
      %v779 = vld [vmem:[%s678 + $0x4] sm:$0xf]
      %v780 = vld [vmem:[%s683] sm:$0xff]
      %v781 = vld [vmem:[%s683 + $0x8] sm:$0xff]
      %v782 = vld [vmem:[%s686] sm:$0x1]
      %v783 = vld [vmem:[%s689] sm:$0x1]
      %v784 = vld [vmem:[%s694] sm:$0xf]
      %v785 = vld [vmem:[%s694 + $0x4] sm:$0xf]
      %v786 = vld [vmem:[%s694 + $0x8] sm:$0xf]
      %v787 = vld [vmem:[%s694 + $0xc] sm:$0xf]
      %v788 = vld [vmem:[%s697] sm:$0x1]
      %v789 = vld [vmem:[%s702] sm:$0xf]
      %v790 = vld [vmem:[%s702 + $0x4] sm:$0xf]
      %v791 = vld [vmem:[%s702 + $0x8] sm:$0xf]
      %v792 = vld [vmem:[%s702 + $0xc] sm:$0xf]
      %v793 = vld [vmem:[%s702 + $0x10] sm:$0xf]
      %v794 = vld [vmem:[%s702 + $0x14] sm:$0xf]
      %v795 = vld [vmem:[%s702 + $0x18] sm:$0xf]
      %v796 = vld [vmem:[%s702 + $0x1c] sm:$0xf]
      %v797 = vld [vmem:[%s702 + $0x20] sm:$0xf]
      %v798 = vld [vmem:[%s702 + $0x24] sm:$0xf]
      %v799 = vld [vmem:[%s702 + $0x28] sm:$0xf]
      %v800 = vld [vmem:[%s702 + $0x2c] sm:$0xf]
      %v801 = vld [vmem:[%s702 + $0x30] sm:$0xf]
      %v802 = vld [vmem:[%s702 + $0x34] sm:$0xf]
      %v803 = vld [vmem:[%s702 + $0x38] sm:$0xf]
      %v804 = vld [vmem:[%s702 + $0x3c] sm:$0xf]
      %v805 = vld [vmem:[%s705] sm:$0x1]
      %v806 = vld [vmem:[%s710] sm:$0xff]
      %v807 = vld [vmem:[%s710 + $0x8] sm:$0xff]
      %vm808 = vcmask 261120
      %v809 = vsel %vm808, %v806, 0.0
      %810 = vadd.xlane.f32.xlu0 %v809
      %v811 = vpop.xlane.xlu0 %810
      %v812 = vsel %vm808, %v807, 0.0
      %813 = vadd.xlane.f32.xlu0 %v812
      %v814 = vpop.xlane.xlu0 %813
      %v815 = vrcp.pop 32.0
      %v816 = vmul.f32 32.0, %v815
      %v817 = vsub.f32 1.0, %v816
      %v818 = vmul.f32 %v815, %v817
      %v819 = vadd.f32 %v815, %v818
      %vm820 = vweird.f32 %v815
      %v821 = vsel %vm820, %v815, %v819
      %v822 = vmul.f32 %v811, %v821
      %v823 = vmul.f32 %v814, %v821
      %v824 = vsub.f32 %v806, %v822
      %v825 = vsub.f32 %v807, %v823
      %v826 = vmul.f32 %v824, %v824
      %v827 = vmul.f32 %v825, %v825
      %v828 = vsel %vm808, %v826, 0.0
      %829 = vadd.xlane.f32.xlu0 %v828
      %v830 = vpop.xlane.xlu0 %829
      %v831 = vsel %vm808, %v827, 0.0
      %832 = vadd.xlane.f32.xlu0 %v831
      %v833 = vpop.xlane.xlu0 %832
      %v834 = vmul.f32 %v830, %v821
      %v835 = vmul.f32 %v833, %v821
      %v836 = vadd.f32 %v834, 1e-06
      %v837 = vadd.f32 %v835, 1e-06
      %v838 = vrsqrt.pop %v836
      %v839 = vmul.f32 %v838, %v836
      %v840 = vmul.f32 %v839, %v838
      %v841 = vmul.f32 0.5, %v840
      %v842 = vsub.f32 1.5, %v841
      %v843 = vmul.f32 %v838, %v842
      %vm844 = vweird.f32 %v836
      %vm845 = vweird.f32 %v838
      %vm846 = vmor %vm844, %vm845
      %v847 = vsel %vm846, %v838, %v843
      %v848 = vrsqrt.pop %v837
      %v849 = vmul.f32 %v848, %v837
      %v850 = vmul.f32 %v849, %v848
      %v851 = vmul.f32 0.5, %v850
      %v852 = vsub.f32 1.5, %v851
      %v853 = vmul.f32 %v848, %v852
      %vm854 = vweird.f32 %v837
      %vm855 = vweird.f32 %v848
      %vm856 = vmor %vm854, %vm855
      %v857 = vsel %vm856, %v848, %v853
      %v858 = vmul.f32 %v824, %v847
      %v859 = vmul.f32 %v825, %v857
      %v861 = vperm.slane %v772, 0
      %v863 = vmul.f32 %v858, %v861
      %v864 = vmul.f32 %v859, %v861
      %v866 = vperm.slane %v773, 0
      %v868 = vadd.f32 %v863, %v866
      %v869 = vadd.f32 %v864, %v866
      %v870 = vpack.c.bf16 %v869, %v868
      %872 = vset.pattern.permute.xlu0 0
      %873 = vperm.xlu0 %872, %v776
      %v874 = vpop.permute.xlu0 %873
      %877 = vset.pattern.permute.xlu0 0
      %878 = vperm.xlu0 %877, %v777
      %v879 = vpop.permute.xlu0 %878
      %v883 = vunpack.c.l.b16 %v774
      %v884 = vunpack.c.l.b16 %v775
      %v885 = vpack.c.b16 %v884, %v883
      %vm886 = vcmask 130048
      %v888 = vsel %vm886, %v885, 0
      %890 = vmatpush.bf16.msra.mxu0 0
      %891 = vmatpush.bf16.msra.mxu0 0
      %892 = vmatpush.bf16.msra.mxu0 0
      %893 = vmatpush.bf16.msra.mxu0 0
      %894 = vmatpush.bf16.msra.mxu0 0
      %895 = vmatpush.bf16.msra.mxu0 0
      %896 = vmatpush.bf16.msra.mxu0 0
      %897 = vmatpush.bf16.msra.mxu0 %v870
      %898 = vmatmul.bf16.gmra.mxu0 %v888
      %v899 = vpop.f32.mrf.mxu0
      %v900 = vadd.f32 %v874, %v899
      %v901 = vpop.f32.mrf.mxu0
      %v902 = vadd.f32 %v879, %v901
      %903 = vdwg.mxu0
      %v904 = vmul.f32 %v900, 0.5
      %v905 = vmul.f32 %v902, 0.5
      %v906 = vmul.f32 %v900, %v900
      %v907 = vmul.f32 %v902, %v902
      %v908 = vmul.f32 %v906, %v900
      %v909 = vmul.f32 %v907, %v902
      %v910 = vmul.f32 %v908, 0.044715
      %v911 = vmul.f32 %v909, 0.044715
      %v912 = vadd.f32 %v900, %v910
      %v913 = vadd.f32 %v902, %v911
      %v914 = vmul.f32 %v912, 0.7978846
      %v915 = vmul.f32 %v913, 0.7978846
      %v916 = vtanh.pop %v914
      %v917 = vtanh.pop %v915
      %v918 = vadd.f32 %v916, 1.0
      %v919 = vadd.f32 %v917, 1.0
      %v920 = vmul.f32 %v904, %v918
      %v921 = vmul.f32 %v905, %v919
      %v922 = vpack.c.bf16 %v921, %v920
      %924 = vset.pattern.permute.xlu0 0
      %925 = vperm.xlu0 %924, %v780
      %v926 = vpop.permute.xlu0 %925
      %929 = vset.pattern.permute.xlu0 0
      %930 = vperm.xlu0 %929, %v781
      %v931 = vpop.permute.xlu0 %930
      %v935 = vunpack.c.l.b16 %v778
      %v936 = vunpack.c.l.b16 %v779
      %v937 = vpack.c.b16 %v936, %v935
      %v939 = vsel %vm886, %v937, 0
      %941 = vmatpush.bf16.msra.mxu0 0
      %942 = vmatpush.bf16.msra.mxu0 0
      %943 = vmatpush.bf16.msra.mxu0 0
      %944 = vmatpush.bf16.msra.mxu0 0
      %945 = vmatpush.bf16.msra.mxu0 0
      %946 = vmatpush.bf16.msra.mxu0 0
      %947 = vmatpush.bf16.msra.mxu0 0
      %948 = vmatpush.bf16.msra.mxu0 %v922
      %949 = vmatmul.bf16.gmra.mxu0 %v939
      %v950 = vpop.f32.mrf.mxu0
      %v951 = vadd.f32 %v926, %v950
      %v952 = vpop.f32.mrf.mxu0
      %v953 = vadd.f32 %v931, %v952
      %954 = vdwg.mxu0
      %v955 = vadd.f32 %v806, %v951
      %v956 = vadd.f32 %v807, %v953
      %v957 = vsel %vm808, %v955, 0.0
      %958 = vadd.xlane.f32.xlu0 %v957
      %v959 = vpop.xlane.xlu0 %958
      %v960 = vsel %vm808, %v956, 0.0
      %961 = vadd.xlane.f32.xlu0 %v960
      %v962 = vpop.xlane.xlu0 %961
      %v963 = vmul.f32 %v959, %v821
      %v964 = vmul.f32 %v962, %v821
      %v965 = vsub.f32 %v955, %v963
      %v966 = vsub.f32 %v956, %v964
      %v967 = vmul.f32 %v965, %v965
      %v968 = vmul.f32 %v966, %v966
      %v969 = vsel %vm808, %v967, 0.0
      %970 = vadd.xlane.f32.xlu0 %v969
      %v971 = vpop.xlane.xlu0 %970
      %v972 = vsel %vm808, %v968, 0.0
      %973 = vadd.xlane.f32.xlu0 %v972
      %v974 = vpop.xlane.xlu0 %973
      %v975 = vmul.f32 %v971, %v821
      %v976 = vmul.f32 %v974, %v821
      %v977 = vadd.f32 %v975, 1e-06
      %v978 = vadd.f32 %v976, 1e-06
      %v979 = vrsqrt.pop %v977
      %v980 = vmul.f32 %v979, %v977
      %v981 = vmul.f32 %v980, %v979
      %v982 = vmul.f32 0.5, %v981
      %v983 = vsub.f32 1.5, %v982
      %v984 = vmul.f32 %v979, %v983
      %vm985 = vweird.f32 %v977
      %vm986 = vweird.f32 %v979
      %vm987 = vmor %vm985, %vm986
      %v988 = vsel %vm987, %v979, %v984
      %v989 = vrsqrt.pop %v978
      %v990 = vmul.f32 %v989, %v978
      %v991 = vmul.f32 %v990, %v989
      %v992 = vmul.f32 0.5, %v991
      %v993 = vsub.f32 1.5, %v992
      %v994 = vmul.f32 %v989, %v993
      %vm995 = vweird.f32 %v978
      %vm996 = vweird.f32 %v989
      %vm997 = vmor %vm995, %vm996
      %v998 = vsel %vm997, %v989, %v994
      %v999 = vmul.f32 %v965, %v988
      %v1000 = vmul.f32 %v966, %v998
      %v1002 = vperm.slane %v782, 0
      %v1004 = vmul.f32 %v999, %v1002
      %v1005 = vmul.f32 %v1000, %v1002
      %v1007 = vperm.slane %v783, 0
      %v1009 = vadd.f32 %v1004, %v1007
      %v1010 = vadd.f32 %v1005, %v1007
      %v1011 = vpack.c.bf16 %v1010, %v1009
      %v1013 = vperm.slane %v788, 0
      %v1019 = vunpack.c.l.b16 %v784
      %v1020 = vunpack.c.l.b16 %v785
      %v1021 = vunpack.c.l.b16 %v786
      %v1022 = vunpack.c.l.b16 %v787
      %v1023 = vpack.c.b16 %v1020, %v1019
      %v1024 = vpack.c.b16 %v1022, %v1021
      %v1028 = vsel %vm808, %v1011, 0
      %1030 = vmatpush.bf16.msra.mxu0 0
      %1031 = vmatpush.bf16.msra.mxu0 0
      %1032 = vmatpush.bf16.msra.mxu0 0
      %1033 = vmatpush.bf16.msra.mxu0 0
      %1034 = vmatpush.bf16.msra.mxu0 0
      %1035 = vmatpush.bf16.msra.mxu0 0
      %1036 = vmatpush.bf16.msra.mxu0 %v1024
      %1037 = vmatpush.bf16.msra.mxu0 %v1023
      %1038 = vmatmul.bf16.gmra.mxu0 %v1028
      %v1039 = vpop.f32.mrf.mxu0
      %v1040 = vadd.f32 %v1013, %v1039
      %v1041 = vpop.f32.mrf.mxu0
      %v1042 = vadd.f32 %v1013, %v1041
      %1043 = vdwg.mxu0
      %v1044 = vmul.f32 %v1040, 0.5
      %v1045 = vmul.f32 %v1042, 0.5
      %v1046 = vmul.f32 %v1040, %v1040
      %v1047 = vmul.f32 %v1042, %v1042
      %v1048 = vmul.f32 %v1046, %v1040
      %v1049 = vmul.f32 %v1047, %v1042
      %v1050 = vmul.f32 %v1048, 0.044715
      %v1051 = vmul.f32 %v1049, 0.044715
      %v1052 = vadd.f32 %v1040, %v1050
      %v1053 = vadd.f32 %v1042, %v1051
      %v1054 = vmul.f32 %v1052, 0.7978846
      %v1055 = vmul.f32 %v1053, 0.7978846
      %v1056 = vtanh.pop %v1054
      %v1057 = vtanh.pop %v1055
      %v1058 = vadd.f32 %v1056, 1.0
      %v1059 = vadd.f32 %v1057, 1.0
      %v1060 = vmul.f32 %v1044, %v1058
      %v1061 = vmul.f32 %v1045, %v1059
      %v1062 = vpack.c.bf16 %v1061, %v1060
      %v1064 = vperm.slane %v805, 0
      %v1082 = vunpack.c.l.b16 %v789
      %v1083 = vunpack.c.l.b16 %v790
      %v1084 = vunpack.c.l.b16 %v791
      %v1085 = vunpack.c.l.b16 %v792
      %v1086 = vunpack.c.l.b16 %v793
      %v1087 = vunpack.c.l.b16 %v794
      %v1088 = vunpack.c.l.b16 %v795
      %v1089 = vunpack.c.l.b16 %v796
      %v1090 = vunpack.c.l.b16 %v797
      %v1091 = vunpack.c.l.b16 %v798
      %v1092 = vunpack.c.l.b16 %v799
      %v1093 = vunpack.c.l.b16 %v800
      %v1094 = vunpack.c.l.b16 %v801
      %v1095 = vunpack.c.l.b16 %v802
      %v1096 = vunpack.c.l.b16 %v803
      %v1097 = vunpack.c.l.b16 %v804
      %v1098 = vpack.c.b16 %v1083, %v1082
      %v1099 = vpack.c.b16 %v1085, %v1084
      %v1100 = vpack.c.b16 %v1087, %v1086
      %v1101 = vpack.c.b16 %v1089, %v1088
      %v1102 = vpack.c.b16 %v1091, %v1090
      %v1103 = vpack.c.b16 %v1093, %v1092
      %v1104 = vpack.c.b16 %v1095, %v1094
      %v1105 = vpack.c.b16 %v1097, %v1096
      %1114 = vmatpush.bf16.msra.mxu0 %v1105
      %1115 = vmatpush.bf16.msra.mxu0 %v1104
      %1116 = vmatpush.bf16.msra.mxu0 %v1103
      %1117 = vmatpush.bf16.msra.mxu0 %v1102
      %1118 = vmatpush.bf16.msra.mxu0 %v1101
      %1119 = vmatpush.bf16.msra.mxu0 %v1100
      %1120 = vmatpush.bf16.msra.mxu0 %v1099
      %1121 = vmatpush.bf16.msra.mxu0 %v1098
      %1122 = vmatmul.bf16.gmra.mxu0 %v1062
      %v1123 = vpop.f32.mrf.mxu0
      %v1124 = vadd.f32 %v1064, %v1123
      %v1125 = vpop.f32.mrf.mxu0
      %v1126 = vadd.f32 %v1064, %v1125
      %1127 = vdwg.mxu0
      %v1128 = vadd.f32 %v955, %v1124
      %v1129 = vadd.f32 %v956, %v1126
      %1130 = vst.msk [vmem:[%s710] sm:$0xff] %vm808, %v1128
      %1131 = vst.msk [vmem:[%s710 + $0x8] sm:$0xff] %vm808, %v1129
      %p1132 = scmp.lt.s32.totalorder %s30, 1
      %s1133 = scalar_select %p1132, %s30, 1
      %s1134 = smul.addr %s1133, 2
      %s1135 = smul.addr %s1134, 8
      %s1136 = scalar_lea.vmem %s15, %s1135
      // Predicated region
      $region85: #{mlp_mixer_forward.2} parent=79 // pred_check
        %p1137 = pneg %p436
      $region86: #{mlp_mixer_forward.2} parent=79 // pred_check_branch
        %1139 = sbr.rel (%p1137) target = $region88
      $region87: #{mlp_mixer_forward.2} parent=79 // pred_region
        _
      $region88: #{mlp_mixer_forward.2} parent=79 // pred_fallthru
        _
    $region80: #{mlp_mixer_forward.2} parent=5 // pred_fallthru
      _
    %p1140 = scmp.le.s32.totalorder 2, %s21
    // Predicated region
    $region89: #{mlp_mixer_forward.2} parent=5 // pred_check
      %p1141 = pneg %p1140
    $region90: #{mlp_mixer_forward.2} parent=5 // pred_check_branch
      %1143 = sbr.rel (%p1141) target = $region92
    $region91: #{mlp_mixer_forward.2} parent=5 // pred_region
      %s1144 = ssub.s32 %s21, 2
      // Predicated region
      $region93: #{mlp_mixer_forward.2} parent=91 // pred_check
        %p1145 = pneg %p442
      $region94: #{mlp_mixer_forward.2} parent=91 // pred_check_branch
        %1147 = sbr.rel (%p1145) target = $region96
      $region95: #{mlp_mixer_forward.2} parent=91 // pred_region
        %p1148 = scmp.lt.s32.totalorder %s32, 1
        %s1149 = scalar_select %p1148, %s32, 1
        %s1150 = smul.addr %s1149, 2
        %s1151 = smul.addr %s1150, 8
        %s1152 = scalar_lea.vmem %s15, %s1151
      $region96: #{mlp_mixer_forward.2} parent=91 // pred_fallthru
        _
    $region92: #{mlp_mixer_forward.2} parent=5 // pred_fallthru
      _
  $region6: #{mlp_mixer_forward.2} parent=0 // loop_footer
    %s25 = sadd.s32 1, %s21
  $region7: #{mlp_mixer_forward.2} parent=0 // loop_footer_branch
    %20 = sbr.rel target = $region3
  $region8: #{mlp_mixer_forward.2} parent=0 // loop_exit
    _

</llo_original>
